<compile_context>
chip_gen: v7x
topology: tpu7x:2x2x1
jax: 0.10.0
libtpu: 0.0.40
codegen_flags: <defaults>
</compile_context>

<pallas_src>
import functools

import jax
import jax.numpy as jnp
from jax.experimental import pallas as pl
from jax.experimental.pallas import tpu as pltpu

BN_EPS = 1e-5


def _round_up(x, m):
    return (x + m - 1) // m * m


# ---------------------------------------------------------------------------
# Pass A (first block only): h1 = a @ W1 (bf16 out), accumulate stats, fold
# BN1 into (scale, shift) at the last grid step.
# ---------------------------------------------------------------------------
def _matmul_stats_fold(a, w_bf16, bn1p, *, tn, grid_n, n_real, vmem_bytes):
    np_, fp = a.shape
    inv_n = 1.0 / float(n_real)

    def kernel(a_ref, w_ref, bnp_ref, h_ref, ss_ref, sum_ref, sq_ref):
        i = pl.program_id(0)

        @pl.when(i == 0)
        def _():
            sum_ref[...] = jnp.zeros_like(sum_ref)
            sq_ref[...] = jnp.zeros_like(sq_ref)

        h = jnp.dot(a_ref[...].astype(jnp.bfloat16), w_ref[...],
                    preferred_element_type=jnp.float32)
        hb = h.astype(jnp.bfloat16)
        h_ref[...] = hb
        # Stats of the bf16-rounded values that will actually be normalized.
        hf = hb.astype(jnp.float32)
        sum_ref[...] += jnp.sum(hf, axis=0, keepdims=True)
        sq_ref[...] += jnp.sum(hf * hf, axis=0, keepdims=True)
        # Padded batch rows of `a` are exactly 0 -> contribute 0 to the sums.

        @pl.when(i == grid_n - 1)
        def _():
            mean = sum_ref[...] * inv_n
            var = jnp.maximum(sq_ref[...] * inv_n - mean * mean, 0.0)
            scale = bnp_ref[0:1, :] * jax.lax.rsqrt(var + BN_EPS)
            ss_ref[0:1, :] = scale
            ss_ref[1:2, :] = bnp_ref[1:2, :] - mean * scale

    return pl.pallas_call(
        kernel,
        grid=(grid_n,),
        in_specs=[pl.BlockSpec((tn, fp), lambda i: (i, 0)),
                  pl.BlockSpec((fp, fp), lambda i: (0, 0)),
                  pl.BlockSpec((2, fp), lambda i: (0, 0))],
        out_specs=(pl.BlockSpec((tn, fp), lambda i: (i, 0)),
                   pl.BlockSpec((2, fp), lambda i: (0, 0))),
        out_shape=(jax.ShapeDtypeStruct((np_, fp), jnp.bfloat16),
                   jax.ShapeDtypeStruct((2, fp), jnp.float32)),
        scratch_shapes=[pltpu.VMEM((1, fp), jnp.float32),
                        pltpu.VMEM((1, fp), jnp.float32)],
        compiler_params=pltpu.CompilerParams(
            dimension_semantics=("arbitrary",),
            vmem_limit_bytes=vmem_bytes),
    )(a, w_bf16, bn1p)


# ---------------------------------------------------------------------------
# Pass B: r = relu(h1*scale1+shift1); h2 = r @ W2; accumulate stats; fold BN2
# into (scale, shift) at the last grid step.
# ---------------------------------------------------------------------------
def _bn_relu_matmul_stats_fold(h1, ss1, bn2p, w2_bf16, *, tn, grid_n, n_real,
                               need_mask, vmem_bytes):
    np_, fp = h1.shape
    inv_n = 1.0 / float(n_real)

    def kernel(h1_ref, ss1_ref, bnp_ref, w_ref, h2_ref, ss2_ref,
               sum_ref, sq_ref):
        i = pl.program_id(0)

        @pl.when(i == 0)
        def _():
            sum_ref[...] = jnp.zeros_like(sum_ref)
            sq_ref[...] = jnp.zeros_like(sq_ref)

        r = jnp.maximum(
            h1_ref[...].astype(jnp.float32) * ss1_ref[0:1, :] + ss1_ref[1:2, :],
            0.0)
        h2 = jnp.dot(r.astype(jnp.bfloat16), w_ref[...],
                     preferred_element_type=jnp.float32)
        h2_ref[...] = h2

        if need_mask:
            # Only the last row tile can contain padded batch rows; exclude
            # them from the batch statistics there.  The h2 values of padded
            # rows are masked (pass CA) or sliced away (final output) later.
            @pl.when(i < grid_n - 1)
            def _():
                sum_ref[...] += jnp.sum(h2, axis=0, keepdims=True)
                sq_ref[...] += jnp.sum(h2 * h2, axis=0, keepdims=True)

            @pl.when(i == grid_n - 1)
            def _():
                row = i * tn + jax.lax.broadcasted_iota(jnp.int32, (tn, 1), 0)
                h2m = jnp.where(row < n_real, h2, 0.0)
                sum_ref[...] += jnp.sum(h2m, axis=0, keepdims=True)
                sq_ref[...] += jnp.sum(h2m * h2m, axis=0, keepdims=True)
        else:
            sum_ref[...] += jnp.sum(h2, axis=0, keepdims=True)
            sq_ref[...] += jnp.sum(h2 * h2, axis=0, keepdims=True)

        @pl.when(i == grid_n - 1)
        def _():
            mean = sum_ref[...] * inv_n
            var = jnp.maximum(sq_ref[...] * inv_n - mean * mean, 0.0)
            scale = bnp_ref[0:1, :] * jax.lax.rsqrt(var + BN_EPS)
            ss2_ref[0:1, :] = scale
            ss2_ref[1:2, :] = bnp_ref[1:2, :] - mean * scale

    return pl.pallas_call(
        kernel,
        grid=(grid_n,),
        in_specs=[pl.BlockSpec((tn, fp), lambda i: (i, 0)),
                  pl.BlockSpec((2, fp), lambda i: (0, 0)),
                  pl.BlockSpec((2, fp), lambda i: (0, 0)),
                  pl.BlockSpec((fp, fp), lambda i: (0, 0))],
        out_specs=(pl.BlockSpec((tn, fp), lambda i: (i, 0)),
                   pl.BlockSpec((2, fp), lambda i: (0, 0))),
        out_shape=(jax.ShapeDtypeStruct((np_, fp), jnp.float32),
                   jax.ShapeDtypeStruct((2, fp), jnp.float32)),
        scratch_shapes=[pltpu.VMEM((1, fp), jnp.float32),
                        pltpu.VMEM((1, fp), jnp.float32)],
        compiler_params=pltpu.CompilerParams(
            dimension_semantics=("arbitrary",),
            vmem_limit_bytes=vmem_bytes),
    )(h1, ss1, bn2p, w2_bf16)


# ---------------------------------------------------------------------------
# Pass CA (fused block boundary): a' = h2*scale2+shift2 + a (in place), then
# the NEXT block's h1' = a' @ W1' (bf16 out) + stats + BN1' fold.
# ---------------------------------------------------------------------------
def _bn_res_matmul_stats_fold(h2, ss2, a, w1n_bf16, bn1n, *, tn, grid_n,
                              n_real, need_mask, vmem_bytes):
    np_, fp = h2.shape
    inv_n = 1.0 / float(n_real)

    def kernel(h2_ref, ss2_ref, a_ref, w_ref, bnp_ref,
               anew_ref, h1_ref, ss1_ref, sum_ref, sq_ref):
        i = pl.program_id(0)

        @pl.when(i == 0)
        def _():
            sum_ref[...] = jnp.zeros_like(sum_ref)
            sq_ref[...] = jnp.zeros_like(sq_ref)

        out = h2_ref[...] * ss2_ref[0:1, :] + ss2_ref[1:2, :] + a_ref[...]
        if need_mask:
            # Keep padded batch rows exactly zero: they feed both the residual
            # stream and this block-boundary matmul / statistics (select cost
            # is negligible next to the matmul and HBM traffic).
            row = i * tn + jax.lax.broadcasted_iota(jnp.int32, (tn, 1), 0)
            out = jnp.where(row < n_real, out, 0.0)
        anew_ref[...] = out

        h = jnp.dot(out.astype(jnp.bfloat16), w_ref[...],
                    preferred_element_type=jnp.float32)
        hb = h.astype(jnp.bfloat16)
        h1_ref[...] = hb
        hf = hb.astype(jnp.float32)
        sum_ref[...] += jnp.sum(hf, axis=0, keepdims=True)
        sq_ref[...] += jnp.sum(hf * hf, axis=0, keepdims=True)

        @pl.when(i == grid_n - 1)
        def _():
            mean = sum_ref[...] * inv_n
            var = jnp.maximum(sq_ref[...] * inv_n - mean * mean, 0.0)
            scale = bnp_ref[0:1, :] * jax.lax.rsqrt(var + BN_EPS)
            ss1_ref[0:1, :] = scale
            ss1_ref[1:2, :] = bnp_ref[1:2, :] - mean * scale

    return pl.pallas_call(
        kernel,
        grid=(grid_n,),
        in_specs=[pl.BlockSpec((tn, fp), lambda i: (i, 0)),
                  pl.BlockSpec((2, fp), lambda i: (0, 0)),
                  pl.BlockSpec((tn, fp), lambda i: (i, 0)),
                  pl.BlockSpec((fp, fp), lambda i: (0, 0)),
                  pl.BlockSpec((2, fp), lambda i: (0, 0))],
        out_specs=(pl.BlockSpec((tn, fp), lambda i: (i, 0)),
                   pl.BlockSpec((tn, fp), lambda i: (i, 0)),
                   pl.BlockSpec((2, fp), lambda i: (0, 0))),
        out_shape=(jax.ShapeDtypeStruct((np_, fp), jnp.float32),
                   jax.ShapeDtypeStruct((np_, fp), jnp.bfloat16),
                   jax.ShapeDtypeStruct((2, fp), jnp.float32)),
        scratch_shapes=[pltpu.VMEM((1, fp), jnp.float32),
                        pltpu.VMEM((1, fp), jnp.float32)],
        input_output_aliases={2: 0},   # residual stream updated in place
        compiler_params=pltpu.CompilerParams(
            dimension_semantics=("arbitrary",),
            vmem_limit_bytes=vmem_bytes),
    )(h2, ss2, a, w1n_bf16, bn1n)


# ---------------------------------------------------------------------------
# Pass C (final block only): apply folded BN2 and the residual add (in place,
# fully parallel over row tiles).  Padded rows/lanes are sliced away later.
# ---------------------------------------------------------------------------
def _bn_residual(h2, ss2, a, *, tn, grid_n, vmem_bytes):
    np_, fp = h2.shape

    def kernel(h2_ref, ss_ref, a_ref, o_ref):
        o_ref[...] = h2_ref[...] * ss_ref[0:1, :] + ss_ref[1:2, :] + a_ref[...]

    return pl.pallas_call(
        kernel,
        grid=(grid_n,),
        in_specs=[pl.BlockSpec((tn, fp), lambda i: (i, 0)),
                  pl.BlockSpec((2, fp), lambda i: (0, 0)),
                  pl.BlockSpec((tn, fp), lambda i: (i, 0))],
        out_specs=pl.BlockSpec((tn, fp), lambda i: (i, 0)),
        out_shape=jax.ShapeDtypeStruct((np_, fp), jnp.float32),
        input_output_aliases={2: 0},
        compiler_params=pltpu.CompilerParams(
            dimension_semantics=("parallel",),
            vmem_limit_bytes=vmem_bytes),
    )(h2, ss2, a)


# ---------------------------------------------------------------------------
# Wrapper: pad to lane-dense / row-tile-aligned shapes and chain the blocks.
# ---------------------------------------------------------------------------
def posblock_pallas(x, blocks, *, tile_n=1024):
    n, f = x.shape
    fp = _round_up(f, 128)
    # Row tile: multiple of 16 (bf16 sublane packing of the h1 stream).
    tn = _round_up(min(tile_n, _round_up(n, 16)), 16)
    np_ = _round_up(n, tn)
    grid_n = np_ // tn
    need_mask = np_ != n

    # Rough VMEM budget: heaviest pass (CA) streams 14 bytes/element across
    # its row tiles (double-buffered) + a double-buffered bf16 weight.  Keep
    # within [default scoped limit, v7x physical VMEM].
    est = 28 * tn * fp + 4 * fp * fp + (4 << 20)
    vmem_bytes = int(min(max(est, 32 << 20), 64 << 20))

    # Zero-pad batch rows and feature lanes (padded entries stay exactly 0).
    a = jnp.pad(x.astype(jnp.float32), ((0, np_ - n), (0, fp - f)))

    prepped = []
    for (w1, g1, b1, w2, g2, b2) in blocks:
        w1p = jnp.pad(w1, ((0, fp - f), (0, fp - f))).astype(jnp.bfloat16)
        w2p = jnp.pad(w2, ((0, fp - f), (0, fp - f))).astype(jnp.bfloat16)
        bn1p = jnp.pad(jnp.stack([g1, b1], axis=0), ((0, 0), (0, fp - f)))
        bn2p = jnp.pad(jnp.stack([g2, b2], axis=0), ((0, 0), (0, fp - f)))
        prepped.append((w1p, bn1p, w2p, bn2p))

    num_blocks = len(prepped)
    w1p0, bn1p0, _, _ = prepped[0]
    h1, ss1 = _matmul_stats_fold(a, w1p0, bn1p0, tn=tn, grid_n=grid_n,
                                 n_real=n, vmem_bytes=vmem_bytes)
    for k in range(num_blocks):
        _, _, w2p, bn2p = prepped[k]
        h2, ss2 = _bn_relu_matmul_stats_fold(
            h1, ss1, bn2p, w2p, tn=tn, grid_n=grid_n, n_real=n,
            need_mask=need_mask, vmem_bytes=vmem_bytes)
        if k + 1 < num_blocks:
            w1n, bn1n, _, _ = prepped[k + 1]
            a, h1, ss1 = _bn_res_matmul_stats_fold(
                h2, ss2, a, w1n, bn1n, tn=tn, grid_n=grid_n, n_real=n,
                need_mask=need_mask, vmem_bytes=vmem_bytes)
        else:
            a = _bn_residual(h2, ss2, a, tn=tn, grid_n=grid_n,
                             vmem_bytes=vmem_bytes)

    return a[:n, :f]


# ---------------------------------------------------------------------------
# Pure-JAX reference with the same mixed-precision policy (bf16 matmul
# operands, bf16-streamed h1) and training-mode BatchNorm1d.
# ---------------------------------------------------------------------------
def _bn_train(h, gamma, beta):
    mean = jnp.mean(h, axis=0, keepdims=True)
    var = jnp.maximum(jnp.mean(h * h, axis=0, keepdims=True) - mean * mean, 0.0)
    return (h - mean) * jax.lax.rsqrt(var + BN_EPS) * gamma + beta


def posblock_reference(x, blocks):
    h = x.astype(jnp.float32)
    for (w1, g1, b1, w2, g2, b2) in blocks:
        h1 = jnp.dot(h.astype(jnp.bfloat16), w1.astype(jnp.bfloat16),
                     preferred_element_type=jnp.float32)
        h1 = h1.astype(jnp.bfloat16).astype(jnp.float32)  # h1 streamed as bf16
        r = jnp.maximum(_bn_train(h1, g1, b1), 0.0)
        h2 = jnp.dot(r.astype(jnp.bfloat16), w2.astype(jnp.bfloat16),
                     preferred_element_type=jnp.float32)
        out = _bn_train(h2, g2, b2)
        h = out + h
    return h


def _make_params(key, num_features, num_blocks):
    """Deterministic synthetic parameters matching PosBlock.__init__ shapes.

    Linear weights are stored pre-transposed as (F_in, F_out) so the kernel
    does plain row-major matmuls on the MXU.  No linear biases (bn=True).
    """
    def uniform(k, shape, fan_in):
        bound = 1.0 / jnp.sqrt(float(fan_in))
        return jax.random.uniform(k, shape, jnp.float32, -bound, bound)

    keys = jax.random.split(key, 6 * num_blocks)
    it = iter(keys)
    blocks = []
    for _ in range(num_blocks):
        w1 = uniform(next(it), (num_features, num_features), num_features)
        g1 = 1.0 + 0.1 * jax.random.normal(next(it), (num_features,), jnp.float32)
        b1 = 0.1 * jax.random.normal(next(it), (num_features,), jnp.float32)
        w2 = uniform(next(it), (num_features, num_features), num_features)
        g2 = 1.0 + 0.1 * jax.random.normal(next(it), (num_features,), jnp.float32)
        b2 = 0.1 * jax.random.normal(next(it), (num_features,), jnp.float32)
        blocks.append((w1, g1, b1, w2, g2, b2))
    return blocks


if __name__ == "__main__":
    N, OUT_FEATURES, NUM_BLOCKS = 40, 32, 2

    key = jax.random.PRNGKey(0)
    k_x, k_p = jax.random.split(key)
    x = jax.random.normal(k_x, (N, OUT_FEATURES), jnp.float32)
    blocks = _make_params(k_p, OUT_FEATURES, NUM_BLOCKS)

    # tile_n=16 exercises a multi-tile grid, the fused block-boundary pass and
    # the padded-batch-row handling at this small N.
    fwd = jax.jit(functools.partial(posblock_pallas, blocks=blocks, tile_n=16))
    out = jax.block_until_ready(fwd(x))

    ref = posblock_reference(x, blocks)
    assert out.shape == (N, OUT_FEATURES)
    err = float(jnp.max(jnp.abs(out - ref)))
    assert jnp.allclose(out, ref, atol=5e-3, rtol=5e-3), err

    print("KERNEL_OK")
</pallas_src>

<mosaic_0001>
module attributes {stable_mosaic.version = 11 : i64} {
  func.func @kernel(%arg0: i32, %arg1: memref<16x128xf32, #tpu.memory_space<vmem>>, %arg2: memref<128x128xbf16, #tpu.memory_space<vmem>>, %arg3: memref<2x128xf32, #tpu.memory_space<vmem>>, %arg4: memref<16x128xbf16, #tpu.memory_space<vmem>>, %arg5: memref<2x128xf32, #tpu.memory_space<vmem>>, %arg6: memref<1x128xf32, #tpu.memory_space<vmem>>, %arg7: memref<1x128xf32, #tpu.memory_space<vmem>>) attributes {dimension_semantics = [#tpu.dimension_semantics<arbitrary>], iteration_bounds = array<i64: 3>, scalar_prefetch = 0 : i64, scratch_operands = 2 : i64, tpu.core_type = #tpu.core_type<tc>, window_params = [{transform_indices = @transform_0, window_bounds = array<i64: 16, 128>}, {pipeline_mode = #tpu.pipeline_mode<synchronous>, transform_indices = @transform_1, window_bounds = array<i64: 128, 128>}, {pipeline_mode = #tpu.pipeline_mode<synchronous>, transform_indices = @transform_2, window_bounds = array<i64: 2, 128>}, {transform_indices = @transform_3, window_bounds = array<i64: 16, 128>}, {pipeline_mode = #tpu.pipeline_mode<synchronous>, transform_indices = @transform_4, window_bounds = array<i64: 2, 128>}]} {
    %c0_i32 = arith.constant 0 : i32
    %0 = arith.cmpi eq, %arg0, %c0_i32 : i32
    %1 = arith.extui %0 : i1 to i32
    %c0_i32_0 = arith.constant 0 : i32
    %2 = arith.cmpi ne, %1, %c0_i32_0 : i32
    scf.if %2 {
      %cst_17 = arith.constant 0.000000e+00 : f32
      %24 = vector.broadcast %cst_17 : f32 to vector<1x128xf32>
      %c0_18 = arith.constant 0 : index
      %c0_19 = arith.constant 0 : index
      %25 = vector.load %arg6[%c0_18, %c0_19] : memref<1x128xf32, #tpu.memory_space<vmem>>, vector<1x128xf32>
      tpu.vector_store %arg6[%c0_18, %c0_19], %24 {strides = array<i32>} : memref<1x128xf32, #tpu.memory_space<vmem>>, vector<1x128xf32>,
      %cst_20 = arith.constant 0.000000e+00 : f32
      %26 = vector.broadcast %cst_20 : f32 to vector<1x128xf32>
      %c0_21 = arith.constant 0 : index
      %c0_22 = arith.constant 0 : index
      %27 = vector.load %arg7[%c0_21, %c0_22] : memref<1x128xf32, #tpu.memory_space<vmem>>, vector<1x128xf32>
      tpu.vector_store %arg7[%c0_21, %c0_22], %26 {strides = array<i32>} : memref<1x128xf32, #tpu.memory_space<vmem>>, vector<1x128xf32>,
    } else {
    }
    %c0 = arith.constant 0 : index
    %c0_1 = arith.constant 0 : index
    %3 = vector.load %arg1[%c0, %c0_1] : memref<16x128xf32, #tpu.memory_space<vmem>>, vector<16x128xf32>
    %4 = arith.truncf %3 : vector<16x128xf32> to vector<16x128xbf16>
    %c0_2 = arith.constant 0 : index
    %c0_3 = arith.constant 0 : index
    %5 = vector.load %arg2[%c0_2, %c0_3] : memref<128x128xbf16, #tpu.memory_space<vmem>>, vector<128x128xbf16>
    %cst = arith.constant dense<0.000000e+00> : vector<16x128xf32>
    %6 = tpu.matmul %4, %5, %cst {dimension_numbers = #tpu.dot_dimension_numbers<[1], [0], [0], [1], [0, 0, 1, 1], [], []>} : vector<16x128xbf16>, vector<128x128xbf16>, vector<16x128xf32> -> vector<16x128xf32>
    %7 = arith.truncf %6 : vector<16x128xf32> to vector<16x128xbf16>
    %c0_4 = arith.constant 0 : index
    %c0_5 = arith.constant 0 : index
    %8 = vector.load %arg4[%c0_4, %c0_5] : memref<16x128xbf16, #tpu.memory_space<vmem>>, vector<16x128xbf16>
    tpu.vector_store %arg4[%c0_4, %c0_5], %7 {strides = array<i32>} : memref<16x128xbf16, #tpu.memory_space<vmem>>, vector<16x128xbf16>,
    %9 = arith.extf %7 : vector<16x128xbf16> to vector<16x128xf32>
    %c0_6 = arith.constant 0 : index
    %c0_7 = arith.constant 0 : index
    %10 = vector.load %arg6[%c0_6, %c0_7] : memref<1x128xf32, #tpu.memory_space<vmem>>, vector<1x128xf32>
    %cst_8 = arith.constant dense<0.000000e+00> : vector<128xf32>
    %11 = vector.multi_reduction <add>, %9, %cst_8 [0] : vector<16x128xf32> to vector<128xf32>
    %12 = vector.shape_cast %11 : vector<128xf32> to vector<1x128xf32>
    %13 = arith.addf %10, %12 : vector<1x128xf32>
    %c0_9 = arith.constant 0 : index
    %c0_10 = arith.constant 0 : index
    %14 = vector.load %arg6[%c0_9, %c0_10] : memref<1x128xf32, #tpu.memory_space<vmem>>, vector<1x128xf32>
    tpu.vector_store %arg6[%c0_9, %c0_10], %13 {strides = array<i32>} : memref<1x128xf32, #tpu.memory_space<vmem>>, vector<1x128xf32>,
    %c0_11 = arith.constant 0 : index
    %c0_12 = arith.constant 0 : index
    %15 = vector.load %arg7[%c0_11, %c0_12] : memref<1x128xf32, #tpu.memory_space<vmem>>, vector<1x128xf32>
    %16 = arith.mulf %9, %9 : vector<16x128xf32>
    %cst_13 = arith.constant dense<0.000000e+00> : vector<128xf32>
    %17 = vector.multi_reduction <add>, %16, %cst_13 [0] : vector<16x128xf32> to vector<128xf32>
    %18 = vector.shape_cast %17 : vector<128xf32> to vector<1x128xf32>
    %19 = arith.addf %15, %18 : vector<1x128xf32>
    %c0_14 = arith.constant 0 : index
    %c0_15 = arith.constant 0 : index
    %20 = vector.load %arg7[%c0_14, %c0_15] : memref<1x128xf32, #tpu.memory_space<vmem>>, vector<1x128xf32>
    tpu.vector_store %arg7[%c0_14, %c0_15], %19 {strides = array<i32>} : memref<1x128xf32, #tpu.memory_space<vmem>>, vector<1x128xf32>,
    %c2_i32 = arith.constant 2 : i32
    %21 = arith.cmpi eq, %arg0, %c2_i32 : i32
    %22 = arith.extui %21 : i1 to i32
    %c0_i32_16 = arith.constant 0 : i32
    %23 = arith.cmpi ne, %22, %c0_i32_16 : i32
    scf.if %23 {
      %c0_17 = arith.constant 0 : index
      %c0_18 = arith.constant 0 : index
      %24 = vector.load %arg6[%c0_17, %c0_18] : memref<1x128xf32, #tpu.memory_space<vmem>>, vector<1x128xf32>
      %cst_19 = arith.constant 2.500000e-02 : f32
      %25 = vector.broadcast %cst_19 : f32 to vector<1x128xf32>
      %26 = arith.mulf %24, %25 : vector<1x128xf32>
      %c0_20 = arith.constant 0 : index
      %c0_21 = arith.constant 0 : index
      %27 = vector.load %arg7[%c0_20, %c0_21] : memref<1x128xf32, #tpu.memory_space<vmem>>, vector<1x128xf32>
      %cst_22 = arith.constant 2.500000e-02 : f32
      %28 = vector.broadcast %cst_22 : f32 to vector<1x128xf32>
      %29 = arith.mulf %27, %28 : vector<1x128xf32>
      %30 = arith.mulf %26, %26 : vector<1x128xf32>
      %31 = arith.subf %29, %30 : vector<1x128xf32>
      %cst_23 = arith.constant 0.000000e+00 : f32
      %32 = vector.broadcast %cst_23 : f32 to vector<1x128xf32>
      %33 = arith.maximumf %31, %32 : vector<1x128xf32>
      %c0_24 = arith.constant 0 : index
      %c0_25 = arith.constant 0 : index
      %34 = vector.load %arg3[%c0_24, %c0_25] : memref<2x128xf32, #tpu.memory_space<vmem>>, vector<1x128xf32>
      %cst_26 = arith.constant 9.99999974E-6 : f32
      %35 = vector.broadcast %cst_26 : f32 to vector<1x128xf32>
      %36 = arith.addf %33, %35 : vector<1x128xf32>
      %37 = math.rsqrt %36 : vector<1x128xf32>
      %38 = arith.mulf %34, %37 : vector<1x128xf32>
      %c0_27 = arith.constant 0 : index
      %c0_28 = arith.constant 0 : index
      %39 = vector.load %arg5[%c0_27, %c0_28] : memref<2x128xf32, #tpu.memory_space<vmem>>, vector<1x128xf32>
      tpu.vector_store %arg5[%c0_27, %c0_28], %38 {strides = array<i32>} : memref<2x128xf32, #tpu.memory_space<vmem>>, vector<1x128xf32>,
      %c1 = arith.constant 1 : index
      %c0_29 = arith.constant 0 : index
      %40 = vector.load %arg3[%c1, %c0_29] : memref<2x128xf32, #tpu.memory_space<vmem>>, vector<1x128xf32>
      %41 = arith.mulf %26, %38 : vector<1x128xf32>
      %42 = arith.subf %40, %41 : vector<1x128xf32>
      %c1_30 = arith.constant 1 : index
      %c0_31 = arith.constant 0 : index
      %43 = vector.load %arg5[%c1_30, %c0_31] : memref<2x128xf32, #tpu.memory_space<vmem>>, vector<1x128xf32>
      tpu.vector_store %arg5[%c1_30, %c0_31], %42 {strides = array<i32>} : memref<2x128xf32, #tpu.memory_space<vmem>>, vector<1x128xf32>,
    } else {
    }
    return
  }
  func.func @transform_0(%arg0: i32) -> (i32, i32) {
    %c0_i32 = arith.constant 0 : i32
    %c0_i32_0 = arith.constant 0 : i32
    return %arg0, %c0_i32 : i32, i32
  }
  func.func @transform_1(%arg0: i32) -> (i32, i32) {
    %c0_i32 = arith.constant 0 : i32
    %c0_i32_0 = arith.constant 0 : i32
    %c0_i32_1 = arith.constant 0 : i32
    return %c0_i32, %c0_i32_0 : i32, i32
  }
  func.func @transform_2(%arg0: i32) -> (i32, i32) {
    %c0_i32 = arith.constant 0 : i32
    %c0_i32_0 = arith.constant 0 : i32
    %c0_i32_1 = arith.constant 0 : i32
    return %c0_i32, %c0_i32_0 : i32, i32
  }
  func.func @transform_3(%arg0: i32) -> (i32, i32) {
    %c0_i32 = arith.constant 0 : i32
    %c0_i32_0 = arith.constant 0 : i32
    return %arg0, %c0_i32 : i32, i32
  }
  func.func @transform_4(%arg0: i32) -> (i32, i32) {
    %c0_i32 = arith.constant 0 : i32
    %c0_i32_0 = arith.constant 0 : i32
    %c0_i32_1 = arith.constant 0 : i32
    return %c0_i32, %c0_i32_0 : i32, i32
  }
}

module attributes {stable_mosaic.version = 11 : i64} {
  func.func @kernel(%arg0: i32, %arg1: memref<16x128xbf16, #tpu.memory_space<vmem>>, %arg2: memref<2x128xf32, #tpu.memory_space<vmem>>, %arg3: memref<2x128xf32, #tpu.memory_space<vmem>>, %arg4: memref<128x128xbf16, #tpu.memory_space<vmem>>, %arg5: memref<16x128xf32, #tpu.memory_space<vmem>>, %arg6: memref<2x128xf32, #tpu.memory_space<vmem>>, %arg7: memref<1x128xf32, #tpu.memory_space<vmem>>, %arg8: memref<1x128xf32, #tpu.memory_space<vmem>>) attributes {dimension_semantics = [#tpu.dimension_semantics<arbitrary>], iteration_bounds = array<i64: 3>, scalar_prefetch = 0 : i64, scratch_operands = 2 : i64, tpu.core_type = #tpu.core_type<tc>, window_params = [{transform_indices = @transform_0, window_bounds = array<i64: 16, 128>}, {pipeline_mode = #tpu.pipeline_mode<synchronous>, transform_indices = @transform_1, window_bounds = array<i64: 2, 128>}, {pipeline_mode = #tpu.pipeline_mode<synchronous>, transform_indices = @transform_2, window_bounds = array<i64: 2, 128>}, {pipeline_mode = #tpu.pipeline_mode<synchronous>, transform_indices = @transform_3, window_bounds = array<i64: 128, 128>}, {transform_indices = @transform_4, window_bounds = array<i64: 16, 128>}, {pipeline_mode = #tpu.pipeline_mode<synchronous>, transform_indices = @transform_5, window_bounds = array<i64: 2, 128>}]} {
    %c0_i32 = arith.constant 0 : i32
    %0 = arith.cmpi eq, %arg0, %c0_i32 : i32
    %1 = arith.extui %0 : i1 to i32
    %c0_i32_0 = arith.constant 0 : i32
    %2 = arith.cmpi ne, %1, %c0_i32_0 : i32
    scf.if %2 {
      %cst_15 = arith.constant 0.000000e+00 : f32
      %26 = vector.broadcast %cst_15 : f32 to vector<1x128xf32>
      %c0_16 = arith.constant 0 : index
      %c0_17 = arith.constant 0 : index
      %27 = vector.load %arg7[%c0_16, %c0_17] : memref<1x128xf32, #tpu.memory_space<vmem>>, vector<1x128xf32>
      tpu.vector_store %arg7[%c0_16, %c0_17], %26 {strides = array<i32>} : memref<1x128xf32, #tpu.memory_space<vmem>>, vector<1x128xf32>,
      %cst_18 = arith.constant 0.000000e+00 : f32
      %28 = vector.broadcast %cst_18 : f32 to vector<1x128xf32>
      %c0_19 = arith.constant 0 : index
      %c0_20 = arith.constant 0 : index
      %29 = vector.load %arg8[%c0_19, %c0_20] : memref<1x128xf32, #tpu.memory_space<vmem>>, vector<1x128xf32>
      tpu.vector_store %arg8[%c0_19, %c0_20], %28 {strides = array<i32>} : memref<1x128xf32, #tpu.memory_space<vmem>>, vector<1x128xf32>,
    } else {
    }
    %c0 = arith.constant 0 : index
    %c0_1 = arith.constant 0 : index
    %3 = vector.load %arg1[%c0, %c0_1] : memref<16x128xbf16, #tpu.memory_space<vmem>>, vector<16x128xbf16>
    %4 = arith.extf %3 : vector<16x128xbf16> to vector<16x128xf32>
    %c0_2 = arith.constant 0 : index
    %c0_3 = arith.constant 0 : index
    %5 = vector.load %arg2[%c0_2, %c0_3] : memref<2x128xf32, #tpu.memory_space<vmem>>, vector<1x128xf32>
    %6 = vector.broadcast %5 : vector<1x128xf32> to vector<16x128xf32>
    %7 = arith.mulf %4, %6 : vector<16x128xf32>
    %c1 = arith.constant 1 : index
    %c0_4 = arith.constant 0 : index
    %8 = vector.load %arg2[%c1, %c0_4] : memref<2x128xf32, #tpu.memory_space<vmem>>, vector<1x128xf32>
    %9 = vector.broadcast %8 : vector<1x128xf32> to vector<16x128xf32>
    %10 = arith.addf %7, %9 : vector<16x128xf32>
    %cst = arith.constant 0.000000e+00 : f32
    %11 = vector.broadcast %cst : f32 to vector<16x128xf32>
    %12 = arith.maximumf %10, %11 : vector<16x128xf32>
    %13 = arith.truncf %12 : vector<16x128xf32> to vector<16x128xbf16>
    %c0_5 = arith.constant 0 : index
    %c0_6 = arith.constant 0 : index
    %14 = vector.load %arg4[%c0_5, %c0_6] : memref<128x128xbf16, #tpu.memory_space<vmem>>, vector<128x128xbf16>
    %cst_7 = arith.constant dense<0.000000e+00> : vector<16x128xf32>
    %15 = tpu.matmul %13, %14, %cst_7 {dimension_numbers = #tpu.dot_dimension_numbers<[1], [0], [0], [1], [0, 0, 1, 1], [], []>} : vector<16x128xbf16>, vector<128x128xbf16>, vector<16x128xf32> -> vector<16x128xf32>
    %c0_8 = arith.constant 0 : index
    %c0_9 = arith.constant 0 : index
    %16 = vector.load %arg5[%c0_8, %c0_9] : memref<16x128xf32, #tpu.memory_space<vmem>>, vector<16x128xf32>
    tpu.vector_store %arg5[%c0_8, %c0_9], %15 {strides = array<i32>} : memref<16x128xf32, #tpu.memory_space<vmem>>, vector<16x128xf32>,
    %c2_i32 = arith.constant 2 : i32
    %17 = arith.cmpi slt, %arg0, %c2_i32 : i32
    %18 = arith.extui %17 : i1 to i32
    %c0_i32_10 = arith.constant 0 : i32
    %19 = arith.cmpi ne, %18, %c0_i32_10 : i32
    scf.if %19 {
      %c0_15 = arith.constant 0 : index
      %c0_16 = arith.constant 0 : index
      %26 = vector.load %arg7[%c0_15, %c0_16] : memref<1x128xf32, #tpu.memory_space<vmem>>, vector<1x128xf32>
      %cst_17 = arith.constant dense<0.000000e+00> : vector<128xf32>
      %27 = vector.multi_reduction <add>, %15, %cst_17 [0] : vector<16x128xf32> to vector<128xf32>
      %28 = vector.shape_cast %27 : vector<128xf32> to vector<1x128xf32>
      %29 = arith.addf %26, %28 : vector<1x128xf32>
      %c0_18 = arith.constant 0 : index
      %c0_19 = arith.constant 0 : index
      %30 = vector.load %arg7[%c0_18, %c0_19] : memref<1x128xf32, #tpu.memory_space<vmem>>, vector<1x128xf32>
      tpu.vector_store %arg7[%c0_18, %c0_19], %29 {strides = array<i32>} : memref<1x128xf32, #tpu.memory_space<vmem>>, vector<1x128xf32>,
      %c0_20 = arith.constant 0 : index
      %c0_21 = arith.constant 0 : index
      %31 = vector.load %arg8[%c0_20, %c0_21] : memref<1x128xf32, #tpu.memory_space<vmem>>, vector<1x128xf32>
      %32 = arith.mulf %15, %15 : vector<16x128xf32>
      %cst_22 = arith.constant dense<0.000000e+00> : vector<128xf32>
      %33 = vector.multi_reduction <add>, %32, %cst_22 [0] : vector<16x128xf32> to vector<128xf32>
      %34 = vector.shape_cast %33 : vector<128xf32> to vector<1x128xf32>
      %35 = arith.addf %31, %34 : vector<1x128xf32>
      %c0_23 = arith.constant 0 : index
      %c0_24 = arith.constant 0 : index
      %36 = vector.load %arg8[%c0_23, %c0_24] : memref<1x128xf32, #tpu.memory_space<vmem>>, vector<1x128xf32>
      tpu.vector_store %arg8[%c0_23, %c0_24], %35 {strides = array<i32>} : memref<1x128xf32, #tpu.memory_space<vmem>>, vector<1x128xf32>,
    } else {
    }
    %c2_i32_11 = arith.constant 2 : i32
    %20 = arith.cmpi eq, %arg0, %c2_i32_11 : i32
    %21 = arith.extui %20 : i1 to i32
    %c0_i32_12 = arith.constant 0 : i32
    %22 = arith.cmpi ne, %21, %c0_i32_12 : i32
    scf.if %22 {
      %c16_i32 = arith.constant 16 : i32
      %26 = arith.muli %arg0, %c16_i32 : i32
      %27 = tpu.iota {dimensions = array<i32: 0>} : vector<16x1xi32>
      %28 = vector.broadcast %26 : i32 to vector<16x1xi32>
      %29 = arith.addi %28, %27 : vector<16x1xi32>
      %c40_i32 = arith.constant 40 : i32
      %30 = vector.broadcast %c40_i32 : i32 to vector<16x1xi32>
      %31 = arith.cmpi slt, %29, %30 : vector<16x1xi32>
      %cst_15 = arith.constant 0.000000e+00 : f32
      %32 = vector.shape_cast %31 : vector<16x1xi1> to vector<16x1xi1>
      %33 = vector.broadcast %32 : vector<16x1xi1> to vector<16x128xi1>
      %34 = vector.broadcast %cst_15 : f32 to vector<16x128xf32>
      %35 = arith.select %33, %15, %34 : vector<16x128xi1>, vector<16x128xf32>
      %c0_16 = arith.constant 0 : index
      %c0_17 = arith.constant 0 : index
      %36 = vector.load %arg7[%c0_16, %c0_17] : memref<1x128xf32, #tpu.memory_space<vmem>>, vector<1x128xf32>
      %cst_18 = arith.constant dense<0.000000e+00> : vector<128xf32>
      %37 = vector.multi_reduction <add>, %35, %cst_18 [0] : vector<16x128xf32> to vector<128xf32>
      %38 = vector.shape_cast %37 : vector<128xf32> to vector<1x128xf32>
      %39 = arith.addf %36, %38 : vector<1x128xf32>
      %c0_19 = arith.constant 0 : index
      %c0_20 = arith.constant 0 : index
      %40 = vector.load %arg7[%c0_19, %c0_20] : memref<1x128xf32, #tpu.memory_space<vmem>>, vector<1x128xf32>
      tpu.vector_store %arg7[%c0_19, %c0_20], %39 {strides = array<i32>} : memref<1x128xf32, #tpu.memory_space<vmem>>, vector<1x128xf32>,
      %c0_21 = arith.constant 0 : index
      %c0_22 = arith.constant 0 : index
      %41 = vector.load %arg8[%c0_21, %c0_22] : memref<1x128xf32, #tpu.memory_space<vmem>>, vector<1x128xf32>
      %42 = arith.mulf %35, %35 : vector<16x128xf32>
      %cst_23 = arith.constant dense<0.000000e+00> : vector<128xf32>
      %43 = vector.multi_reduction <add>, %42, %cst_23 [0] : vector<16x128xf32> to vector<128xf32>
      %44 = vector.shape_cast %43 : vector<128xf32> to vector<1x128xf32>
      %45 = arith.addf %41, %44 : vector<1x128xf32>
      %c0_24 = arith.constant 0 : index
      %c0_25 = arith.constant 0 : index
      %46 = vector.load %arg8[%c0_24, %c0_25] : memref<1x128xf32, #tpu.memory_space<vmem>>, vector<1x128xf32>
      tpu.vector_store %arg8[%c0_24, %c0_25], %45 {strides = array<i32>} : memref<1x128xf32, #tpu.memory_space<vmem>>, vector<1x128xf32>,
    } else {
    }
    %c2_i32_13 = arith.constant 2 : i32
    %23 = arith.cmpi eq, %arg0, %c2_i32_13 : i32
    %24 = arith.extui %23 : i1 to i32
    %c0_i32_14 = arith.constant 0 : i32
    %25 = arith.cmpi ne, %24, %c0_i32_14 : i32
    scf.if %25 {
      %c0_15 = arith.constant 0 : index
      %c0_16 = arith.constant 0 : index
      %26 = vector.load %arg7[%c0_15, %c0_16] : memref<1x128xf32, #tpu.memory_space<vmem>>, vector<1x128xf32>
      %cst_17 = arith.constant 2.500000e-02 : f32
      %27 = vector.broadcast %cst_17 : f32 to vector<1x128xf32>
      %28 = arith.mulf %26, %27 : vector<1x128xf32>
      %c0_18 = arith.constant 0 : index
      %c0_19 = arith.constant 0 : index
      %29 = vector.load %arg8[%c0_18, %c0_19] : memref<1x128xf32, #tpu.memory_space<vmem>>, vector<1x128xf32>
      %cst_20 = arith.constant 2.500000e-02 : f32
      %30 = vector.broadcast %cst_20 : f32 to vector<1x128xf32>
      %31 = arith.mulf %29, %30 : vector<1x128xf32>
      %32 = arith.mulf %28, %28 : vector<1x128xf32>
      %33 = arith.subf %31, %32 : vector<1x128xf32>
      %cst_21 = arith.constant 0.000000e+00 : f32
      %34 = vector.broadcast %cst_21 : f32 to vector<1x128xf32>
      %35 = arith.maximumf %33, %34 : vector<1x128xf32>
      %c0_22 = arith.constant 0 : index
      %c0_23 = arith.constant 0 : index
      %36 = vector.load %arg3[%c0_22, %c0_23] : memref<2x128xf32, #tpu.memory_space<vmem>>, vector<1x128xf32>
      %cst_24 = arith.constant 9.99999974E-6 : f32
      %37 = vector.broadcast %cst_24 : f32 to vector<1x128xf32>
      %38 = arith.addf %35, %37 : vector<1x128xf32>
      %39 = math.rsqrt %38 : vector<1x128xf32>
      %40 = arith.mulf %36, %39 : vector<1x128xf32>
      %c0_25 = arith.constant 0 : index
      %c0_26 = arith.constant 0 : index
      %41 = vector.load %arg6[%c0_25, %c0_26] : memref<2x128xf32, #tpu.memory_space<vmem>>, vector<1x128xf32>
      tpu.vector_store %arg6[%c0_25, %c0_26], %40 {strides = array<i32>} : memref<2x128xf32, #tpu.memory_space<vmem>>, vector<1x128xf32>,
      %c1_27 = arith.constant 1 : index
      %c0_28 = arith.constant 0 : index
      %42 = vector.load %arg3[%c1_27, %c0_28] : memref<2x128xf32, #tpu.memory_space<vmem>>, vector<1x128xf32>
      %43 = arith.mulf %28, %40 : vector<1x128xf32>
      %44 = arith.subf %42, %43 : vector<1x128xf32>
      %c1_29 = arith.constant 1 : index
      %c0_30 = arith.constant 0 : index
      %45 = vector.load %arg6[%c1_29, %c0_30] : memref<2x128xf32, #tpu.memory_space<vmem>>, vector<1x128xf32>
      tpu.vector_store %arg6[%c1_29, %c0_30], %44 {strides = array<i32>} : memref<2x128xf32, #tpu.memory_space<vmem>>, vector<1x128xf32>,
    } else {
    }
    return
  }
  func.func @transform_0(%arg0: i32) -> (i32, i32) {
    %c0_i32 = arith.constant 0 : i32
    %c0_i32_0 = arith.constant 0 : i32
    return %arg0, %c0_i32 : i32, i32
  }
  func.func @transform_1(%arg0: i32) -> (i32, i32) {
    %c0_i32 = arith.constant 0 : i32
    %c0_i32_0 = arith.constant 0 : i32
    %c0_i32_1 = arith.constant 0 : i32
    return %c0_i32, %c0_i32_0 : i32, i32
  }
  func.func @transform_2(%arg0: i32) -> (i32, i32) {
    %c0_i32 = arith.constant 0 : i32
    %c0_i32_0 = arith.constant 0 : i32
    %c0_i32_1 = arith.constant 0 : i32
    return %c0_i32, %c0_i32_0 : i32, i32
  }
  func.func @transform_3(%arg0: i32) -> (i32, i32) {
    %c0_i32 = arith.constant 0 : i32
    %c0_i32_0 = arith.constant 0 : i32
    %c0_i32_1 = arith.constant 0 : i32
    return %c0_i32, %c0_i32_0 : i32, i32
  }
  func.func @transform_4(%arg0: i32) -> (i32, i32) {
    %c0_i32 = arith.constant 0 : i32
    %c0_i32_0 = arith.constant 0 : i32
    return %arg0, %c0_i32 : i32, i32
  }
  func.func @transform_5(%arg0: i32) -> (i32, i32) {
    %c0_i32 = arith.constant 0 : i32
    %c0_i32_0 = arith.constant 0 : i32
    %c0_i32_1 = arith.constant 0 : i32
    return %c0_i32, %c0_i32_0 : i32, i32
  }
}

module attributes {stable_mosaic.version = 11 : i64} {
  func.func @kernel(%arg0: i32, %arg1: memref<16x128xf32, #tpu.memory_space<vmem>>, %arg2: memref<2x128xf32, #tpu.memory_space<vmem>>, %arg3: memref<16x128xf32, #tpu.memory_space<vmem>>, %arg4: memref<16x128xf32, #tpu.memory_space<vmem>>) attributes {dimension_semantics = [#tpu.dimension_semantics<parallel>], iteration_bounds = array<i64: 3>, scalar_prefetch = 0 : i64, scratch_operands = 0 : i64, tpu.core_type = #tpu.core_type<tc>, window_params = [{transform_indices = @transform_0, window_bounds = array<i64: 16, 128>}, {pipeline_mode = #tpu.pipeline_mode<synchronous>, transform_indices = @transform_1, window_bounds = array<i64: 2, 128>}, {transform_indices = @transform_2, window_bounds = array<i64: 16, 128>}, {transform_indices = @transform_3, window_bounds = array<i64: 16, 128>}]} {
    %c0 = arith.constant 0 : index
    %c0_0 = arith.constant 0 : index
    %0 = vector.load %arg1[%c0, %c0_0] : memref<16x128xf32, #tpu.memory_space<vmem>>, vector<16x128xf32>
    %c0_1 = arith.constant 0 : index
    %c0_2 = arith.constant 0 : index
    %1 = vector.load %arg2[%c0_1, %c0_2] : memref<2x128xf32, #tpu.memory_space<vmem>>, vector<1x128xf32>
    %2 = vector.broadcast %1 : vector<1x128xf32> to vector<16x128xf32>
    %3 = arith.mulf %0, %2 : vector<16x128xf32>
    %c1 = arith.constant 1 : index
    %c0_3 = arith.constant 0 : index
    %4 = vector.load %arg2[%c1, %c0_3] : memref<2x128xf32, #tpu.memory_space<vmem>>, vector<1x128xf32>
    %5 = vector.broadcast %4 : vector<1x128xf32> to vector<16x128xf32>
    %6 = arith.addf %3, %5 : vector<16x128xf32>
    %c0_4 = arith.constant 0 : index
    %c0_5 = arith.constant 0 : index
    %7 = vector.load %arg3[%c0_4, %c0_5] : memref<16x128xf32, #tpu.memory_space<vmem>>, vector<16x128xf32>
    %8 = arith.addf %6, %7 : vector<16x128xf32>
    %c0_6 = arith.constant 0 : index
    %c0_7 = arith.constant 0 : index
    %9 = vector.load %arg4[%c0_6, %c0_7] : memref<16x128xf32, #tpu.memory_space<vmem>>, vector<16x128xf32>
    tpu.vector_store %arg4[%c0_6, %c0_7], %8 {strides = array<i32>} : memref<16x128xf32, #tpu.memory_space<vmem>>, vector<16x128xf32>,
    return
  }
  func.func @transform_0(%arg0: i32) -> (i32, i32) {
    %c0_i32 = arith.constant 0 : i32
    %c0_i32_0 = arith.constant 0 : i32
    return %arg0, %c0_i32 : i32, i32
  }
  func.func @transform_1(%arg0: i32) -> (i32, i32) {
    %c0_i32 = arith.constant 0 : i32
    %c0_i32_0 = arith.constant 0 : i32
    %c0_i32_1 = arith.constant 0 : i32
    return %c0_i32, %c0_i32_0 : i32, i32
  }
  func.func @transform_2(%arg0: i32) -> (i32, i32) {
    %c0_i32 = arith.constant 0 : i32
    %c0_i32_0 = arith.constant 0 : i32
    return %arg0, %c0_i32 : i32, i32
  }
  func.func @transform_3(%arg0: i32) -> (i32, i32) {
    %c0_i32 = arith.constant 0 : i32
    %c0_i32_0 = arith.constant 0 : i32
    return %arg0, %c0_i32 : i32, i32
  }
}

module attributes {stable_mosaic.version = 11 : i64} {
  func.func @kernel(%arg0: i32, %arg1: memref<16x128xf32, #tpu.memory_space<vmem>>, %arg2: memref<2x128xf32, #tpu.memory_space<vmem>>, %arg3: memref<16x128xf32, #tpu.memory_space<vmem>>, %arg4: memref<128x128xbf16, #tpu.memory_space<vmem>>, %arg5: memref<2x128xf32, #tpu.memory_space<vmem>>, %arg6: memref<16x128xf32, #tpu.memory_space<vmem>>, %arg7: memref<16x128xbf16, #tpu.memory_space<vmem>>, %arg8: memref<2x128xf32, #tpu.memory_space<vmem>>, %arg9: memref<1x128xf32, #tpu.memory_space<vmem>>, %arg10: memref<1x128xf32, #tpu.memory_space<vmem>>) attributes {dimension_semantics = [#tpu.dimension_semantics<arbitrary>], iteration_bounds = array<i64: 3>, scalar_prefetch = 0 : i64, scratch_operands = 2 : i64, tpu.core_type = #tpu.core_type<tc>, window_params = [{transform_indices = @transform_0, window_bounds = array<i64: 16, 128>}, {pipeline_mode = #tpu.pipeline_mode<synchronous>, transform_indices = @transform_1, window_bounds = array<i64: 2, 128>}, {transform_indices = @transform_2, window_bounds = array<i64: 16, 128>}, {pipeline_mode = #tpu.pipeline_mode<synchronous>, transform_indices = @transform_3, window_bounds = array<i64: 128, 128>}, {pipeline_mode = #tpu.pipeline_mode<synchronous>, transform_indices = @transform_4, window_bounds = array<i64: 2, 128>}, {transform_indices = @transform_5, window_bounds = array<i64: 16, 128>}, {transform_indices = @transform_6, window_bounds = array<i64: 16, 128>}, {pipeline_mode = #tpu.pipeline_mode<synchronous>, transform_indices = @transform_7, window_bounds = array<i64: 2, 128>}]} {
    %c0_i32 = arith.constant 0 : i32
    %0 = arith.cmpi eq, %arg0, %c0_i32 : i32
    %1 = arith.extui %0 : i1 to i32
    %c0_i32_0 = arith.constant 0 : i32
    %2 = arith.cmpi ne, %1, %c0_i32_0 : i32
    scf.if %2 {
      %cst_25 = arith.constant 0.000000e+00 : f32
      %43 = vector.broadcast %cst_25 : f32 to vector<1x128xf32>
      %c0_26 = arith.constant 0 : index
      %c0_27 = arith.constant 0 : index
      %44 = vector.load %arg9[%c0_26, %c0_27] : memref<1x128xf32, #tpu.memory_space<vmem>>, vector<1x128xf32>
      tpu.vector_store %arg9[%c0_26, %c0_27], %43 {strides = array<i32>} : memref<1x128xf32, #tpu.memory_space<vmem>>, vector<1x128xf32>,
      %cst_28 = arith.constant 0.000000e+00 : f32
      %45 = vector.broadcast %cst_28 : f32 to vector<1x128xf32>
      %c0_29 = arith.constant 0 : index
      %c0_30 = arith.constant 0 : index
      %46 = vector.load %arg10[%c0_29, %c0_30] : memref<1x128xf32, #tpu.memory_space<vmem>>, vector<1x128xf32>
      tpu.vector_store %arg10[%c0_29, %c0_30], %45 {strides = array<i32>} : memref<1x128xf32, #tpu.memory_space<vmem>>, vector<1x128xf32>,
    } else {
    }
    %c0 = arith.constant 0 : index
    %c0_1 = arith.constant 0 : index
    %3 = vector.load %arg1[%c0, %c0_1] : memref<16x128xf32, #tpu.memory_space<vmem>>, vector<16x128xf32>
    %c0_2 = arith.constant 0 : index
    %c0_3 = arith.constant 0 : index
    %4 = vector.load %arg2[%c0_2, %c0_3] : memref<2x128xf32, #tpu.memory_space<vmem>>, vector<1x128xf32>
    %5 = vector.broadcast %4 : vector<1x128xf32> to vector<16x128xf32>
    %6 = arith.mulf %3, %5 : vector<16x128xf32>
    %c1 = arith.constant 1 : index
    %c0_4 = arith.constant 0 : index
    %7 = vector.load %arg2[%c1, %c0_4] : memref<2x128xf32, #tpu.memory_space<vmem>>, vector<1x128xf32>
    %8 = vector.broadcast %7 : vector<1x128xf32> to vector<16x128xf32>
    %9 = arith.addf %6, %8 : vector<16x128xf32>
    %c0_5 = arith.constant 0 : index
    %c0_6 = arith.constant 0 : index
    %10 = vector.load %arg3[%c0_5, %c0_6] : memref<16x128xf32, #tpu.memory_space<vmem>>, vector<16x128xf32>
    %11 = arith.addf %9, %10 : vector<16x128xf32>
    %c16_i32 = arith.constant 16 : i32
    %12 = arith.muli %arg0, %c16_i32 : i32
    %13 = tpu.iota {dimensions = array<i32: 0>} : vector<16x1xi32>
    %14 = vector.broadcast %12 : i32 to vector<16x1xi32>
    %15 = arith.addi %14, %13 : vector<16x1xi32>
    %c40_i32 = arith.constant 40 : i32
    %16 = vector.broadcast %c40_i32 : i32 to vector<16x1xi32>
    %17 = arith.cmpi slt, %15, %16 : vector<16x1xi32>
    %cst = arith.constant 0.000000e+00 : f32
    %18 = vector.shape_cast %17 : vector<16x1xi1> to vector<16x1xi1>
    %19 = vector.broadcast %18 : vector<16x1xi1> to vector<16x128xi1>
    %20 = vector.broadcast %cst : f32 to vector<16x128xf32>
    %21 = arith.select %19, %11, %20 : vector<16x128xi1>, vector<16x128xf32>
    %c0_7 = arith.constant 0 : index
    %c0_8 = arith.constant 0 : index
    %22 = vector.load %arg6[%c0_7, %c0_8] : memref<16x128xf32, #tpu.memory_space<vmem>>, vector<16x128xf32>
    tpu.vector_store %arg6[%c0_7, %c0_8], %21 {strides = array<i32>} : memref<16x128xf32, #tpu.memory_space<vmem>>, vector<16x128xf32>,
    %23 = arith.truncf %21 : vector<16x128xf32> to vector<16x128xbf16>
    %c0_9 = arith.constant 0 : index
    %c0_10 = arith.constant 0 : index
    %24 = vector.load %arg4[%c0_9, %c0_10] : memref<128x128xbf16, #tpu.memory_space<vmem>>, vector<128x128xbf16>
    %cst_11 = arith.constant dense<0.000000e+00> : vector<16x128xf32>
    %25 = tpu.matmul %23, %24, %cst_11 {dimension_numbers = #tpu.dot_dimension_numbers<[1], [0], [0], [1], [0, 0, 1, 1], [], []>} : vector<16x128xbf16>, vector<128x128xbf16>, vector<16x128xf32> -> vector<16x128xf32>
    %26 = arith.truncf %25 : vector<16x128xf32> to vector<16x128xbf16>
    %c0_12 = arith.constant 0 : index
    %c0_13 = arith.constant 0 : index
    %27 = vector.load %arg7[%c0_12, %c0_13] : memref<16x128xbf16, #tpu.memory_space<vmem>>, vector<16x128xbf16>
    tpu.vector_store %arg7[%c0_12, %c0_13], %26 {strides = array<i32>} : memref<16x128xbf16, #tpu.memory_space<vmem>>, vector<16x128xbf16>,
    %28 = arith.extf %26 : vector<16x128xbf16> to vector<16x128xf32>
    %c0_14 = arith.constant 0 : index
    %c0_15 = arith.constant 0 : index
    %29 = vector.load %arg9[%c0_14, %c0_15] : memref<1x128xf32, #tpu.memory_space<vmem>>, vector<1x128xf32>
    %cst_16 = arith.constant dense<0.000000e+00> : vector<128xf32>
    %30 = vector.multi_reduction <add>, %28, %cst_16 [0] : vector<16x128xf32> to vector<128xf32>
    %31 = vector.shape_cast %30 : vector<128xf32> to vector<1x128xf32>
    %32 = arith.addf %29, %31 : vector<1x128xf32>
    %c0_17 = arith.constant 0 : index
    %c0_18 = arith.constant 0 : index
    %33 = vector.load %arg9[%c0_17, %c0_18] : memref<1x128xf32, #tpu.memory_space<vmem>>, vector<1x128xf32>
    tpu.vector_store %arg9[%c0_17, %c0_18], %32 {strides = array<i32>} : memref<1x128xf32, #tpu.memory_space<vmem>>, vector<1x128xf32>,
    %c0_19 = arith.constant 0 : index
    %c0_20 = arith.constant 0 : index
    %34 = vector.load %arg10[%c0_19, %c0_20] : memref<1x128xf32, #tpu.memory_space<vmem>>, vector<1x128xf32>
    %35 = arith.mulf %28, %28 : vector<16x128xf32>
    %cst_21 = arith.constant dense<0.000000e+00> : vector<128xf32>
    %36 = vector.multi_reduction <add>, %35, %cst_21 [0] : vector<16x128xf32> to vector<128xf32>
    %37 = vector.shape_cast %36 : vector<128xf32> to vector<1x128xf32>
    %38 = arith.addf %34, %37 : vector<1x128xf32>
    %c0_22 = arith.constant 0 : index
    %c0_23 = arith.constant 0 : index
    %39 = vector.load %arg10[%c0_22, %c0_23] : memref<1x128xf32, #tpu.memory_space<vmem>>, vector<1x128xf32>
    tpu.vector_store %arg10[%c0_22, %c0_23], %38 {strides = array<i32>} : memref<1x128xf32, #tpu.memory_space<vmem>>, vector<1x128xf32>,
    %c2_i32 = arith.constant 2 : i32
    %40 = arith.cmpi eq, %arg0, %c2_i32 : i32
    %41 = arith.extui %40 : i1 to i32
    %c0_i32_24 = arith.constant 0 : i32
    %42 = arith.cmpi ne, %41, %c0_i32_24 : i32
    scf.if %42 {
      %c0_25 = arith.constant 0 : index
      %c0_26 = arith.constant 0 : index
      %43 = vector.load %arg9[%c0_25, %c0_26] : memref<1x128xf32, #tpu.memory_space<vmem>>, vector<1x128xf32>
      %cst_27 = arith.constant 2.500000e-02 : f32
      %44 = vector.broadcast %cst_27 : f32 to vector<1x128xf32>
      %45 = arith.mulf %43, %44 : vector<1x128xf32>
      %c0_28 = arith.constant 0 : index
      %c0_29 = arith.constant 0 : index
      %46 = vector.load %arg10[%c0_28, %c0_29] : memref<1x128xf32, #tpu.memory_space<vmem>>, vector<1x128xf32>
      %cst_30 = arith.constant 2.500000e-02 : f32
      %47 = vector.broadcast %cst_30 : f32 to vector<1x128xf32>
      %48 = arith.mulf %46, %47 : vector<1x128xf32>
      %49 = arith.mulf %45, %45 : vector<1x128xf32>
      %50 = arith.subf %48, %49 : vector<1x128xf32>
      %cst_31 = arith.constant 0.000000e+00 : f32
      %51 = vector.broadcast %cst_31 : f32 to vector<1x128xf32>
      %52 = arith.maximumf %50, %51 : vector<1x128xf32>
      %c0_32 = arith.constant 0 : index
      %c0_33 = arith.constant 0 : index
      %53 = vector.load %arg5[%c0_32, %c0_33] : memref<2x128xf32, #tpu.memory_space<vmem>>, vector<1x128xf32>
      %cst_34 = arith.constant 9.99999974E-6 : f32
      %54 = vector.broadcast %cst_34 : f32 to vector<1x128xf32>
      %55 = arith.addf %52, %54 : vector<1x128xf32>
      %56 = math.rsqrt %55 : vector<1x128xf32>
      %57 = arith.mulf %53, %56 : vector<1x128xf32>
      %c0_35 = arith.constant 0 : index
      %c0_36 = arith.constant 0 : index
      %58 = vector.load %arg8[%c0_35, %c0_36] : memref<2x128xf32, #tpu.memory_space<vmem>>, vector<1x128xf32>
      tpu.vector_store %arg8[%c0_35, %c0_36], %57 {strides = array<i32>} : memref<2x128xf32, #tpu.memory_space<vmem>>, vector<1x128xf32>,
      %c1_37 = arith.constant 1 : index
      %c0_38 = arith.constant 0 : index
      %59 = vector.load %arg5[%c1_37, %c0_38] : memref<2x128xf32, #tpu.memory_space<vmem>>, vector<1x128xf32>
      %60 = arith.mulf %45, %57 : vector<1x128xf32>
      %61 = arith.subf %59, %60 : vector<1x128xf32>
      %c1_39 = arith.constant 1 : index
      %c0_40 = arith.constant 0 : index
      %62 = vector.load %arg8[%c1_39, %c0_40] : memref<2x128xf32, #tpu.memory_space<vmem>>, vector<1x128xf32>
      tpu.vector_store %arg8[%c1_39, %c0_40], %61 {strides = array<i32>} : memref<2x128xf32, #tpu.memory_space<vmem>>, vector<1x128xf32>,
    } else {
    }
    return
  }
  func.func @transform_0(%arg0: i32) -> (i32, i32) {
    %c0_i32 = arith.constant 0 : i32
    %c0_i32_0 = arith.constant 0 : i32
    return %arg0, %c0_i32 : i32, i32
  }
  func.func @transform_1(%arg0: i32) -> (i32, i32) {
    %c0_i32 = arith.constant 0 : i32
    %c0_i32_0 = arith.constant 0 : i32
    %c0_i32_1 = arith.constant 0 : i32
    return %c0_i32, %c0_i32_0 : i32, i32
  }
  func.func @transform_2(%arg0: i32) -> (i32, i32) {
    %c0_i32 = arith.constant 0 : i32
    %c0_i32_0 = arith.constant 0 : i32
    return %arg0, %c0_i32 : i32, i32
  }
  func.func @transform_3(%arg0: i32) -> (i32, i32) {
    %c0_i32 = arith.constant 0 : i32
    %c0_i32_0 = arith.constant 0 : i32
    %c0_i32_1 = arith.constant 0 : i32
    return %c0_i32, %c0_i32_0 : i32, i32
  }
  func.func @transform_4(%arg0: i32) -> (i32, i32) {
    %c0_i32 = arith.constant 0 : i32
    %c0_i32_0 = arith.constant 0 : i32
    %c0_i32_1 = arith.constant 0 : i32
    return %c0_i32, %c0_i32_0 : i32, i32
  }
  func.func @transform_5(%arg0: i32) -> (i32, i32) {
    %c0_i32 = arith.constant 0 : i32
    %c0_i32_0 = arith.constant 0 : i32
    return %arg0, %c0_i32 : i32, i32
  }
  func.func @transform_6(%arg0: i32) -> (i32, i32) {
    %c0_i32 = arith.constant 0 : i32
    %c0_i32_0 = arith.constant 0 : i32
    return %arg0, %c0_i32 : i32, i32
  }
  func.func @transform_7(%arg0: i32) -> (i32, i32) {
    %c0_i32 = arith.constant 0 : i32
    %c0_i32_0 = arith.constant 0 : i32
    %c0_i32_1 = arith.constant 0 : i32
    return %c0_i32, %c0_i32_0 : i32, i32
  }
}

</mosaic_0001>

<llo_original>
// kernel: posblock_pallas.5
$region0: #{posblock_pallas.5}
  #allocation0 [shape = 'u32[]', space=smem, size = 0x4, offset = 0x4, fixed_abs, tag = 'smem constant byte address 0x4 - core index']
  #allocation1 [shape = 'u32[144,128]{1,0:T(1,128)}', space=vmem, size = 0x12000, scoped, tag = 'internal scratch']
  #allocation2 [shape = 'f32[1,128]{1,0:T(1,128)}', space=vmem, size = 0x200, scoped, tag = 'scratch operand']
  #allocation3 [shape = 'f32[1,128]{1,0:T(1,128)}', space=vmem, size = 0x200, scoped, tag = 'scratch operand']
  %s0 = inlined_call_operand.vmem [shape: f32[48,128], index: 0, kind: input, shape index: {}]
  %s1 = inlined_call_operand.vmem [shape: bf16[128,128], index: 1, kind: input, shape index: {}]
  %s2 = inlined_call_operand.vmem [shape: f32[2,128], index: 2, kind: input, shape index: {}]
  %s3 = inlined_call_operand.vmem [shape: bf16[48,128], index: 3, kind: output, shape index: {0}]
  %s4 = inlined_call_operand.vmem [shape: f32[2,128], index: 4, kind: output, shape index: {1}]
  %5 = xla_tuple %s3, %s4
  %s6 = sld [smem:[#allocation0]]
  $region61: #{posblock_pallas.5} parent=0
    _
  %s8 = ssub.s32 1, %s6
  %s9 = scalar_select 0, %s8, %s6
  loop: start=0, step=1, limit=5
  $region2: #{posblock_pallas.5} parent=0 // loop_pre_header
    _
  $region3: #{posblock_pallas.5} parent=0 // loop_header
    %s11 = sphi 0, %s15
    %p12 = scmp.ge.s32.totalorder %s11, 5
    %s21 = sphi 0, %s23
    %s24 = sphi 0, %s21
    %s25 = sphi 0, %s24
    %s41 = sphi 0, %s25
    %s45 = sphi 0, %s45
    %s47 = sphi 0, %s45
    %s48 = sphi 0, %s47
    %s62 = sphi 0, %s48
    %s66 = sphi 0, %s66
    %s68 = sphi 0, %s66
    %s69 = sphi 0, %s68
    %s83 = sphi 0, %s69
    %s89 = sphi 0, %s91
    %s92 = sphi 0, %s89
    %s93 = sphi 0, %s92
    %s109 = sphi 0, %s93
    %s113 = sphi 0, %s113
    %s115 = sphi 0, %s113
    %s116 = sphi 0, %s115
    %s130 = sphi 0, %s116
  $region4: #{posblock_pallas.5} parent=0 // loop_header_branch
    %14 = sbr.rel (%p12) target = $region8
  $region5: #{posblock_pallas.5} parent=0 // loop_body
    %s16 = ssub.s32 %s11, 1
    %s17 = ssub.s32 %s11, 2
    %s18 = sadd.s32 %s11, 1
    %s19 = ssub.s32 %s11, %s18
    %p20 = scmp.eq.s32.totalorder %s19, 0
    %s22 = sadd.s32 %s21, 1
    %s23 = scalar_select %p20, %s21, %s22
    %p26 = pneg %p20
    %p27 = scmp.eq.s32.totalorder %s11, 2
    %p28 = por %p26, %p27
    %p29 = scmp.ne.s32.totalorder %s21, %s24
    %p30 = scmp.eq.s32.totalorder %s11, 0
    %p31 = por %p29, %p30
    %p32 = scmp.ne.s32.totalorder %s21, %s24
    %p33 = scmp.eq.s32.totalorder %s16, 2
    %p34 = por %p32, %p33
    %p35 = scmp.ne.s32.totalorder %s24, %s25
    %p36 = scmp.eq.s32.totalorder %s16, 0
    %p37 = por %p35, %p36
    %p38 = scmp.ne.s32.totalorder %s24, %s25
    %p39 = scmp.eq.s32.totalorder %s17, 2
    %p40 = por %p38, %p39
    %p42 = scmp.ne.s32.totalorder %s25, %s41
    %p43 = scmp.eq.s32.totalorder %s17, 0
    %p44 = por %p42, %p43
    %s46 = sadd.s32 %s45, 1
    %p49 = scmp.eq.s32.totalorder %s11, 2
    %p50 = scmp.ne.s32.totalorder %s45, %s47
    %p51 = scmp.eq.s32.totalorder %s11, 0
    %p52 = por %p50, %p51
    %p53 = scmp.ne.s32.totalorder %s45, %s47
    %p54 = scmp.eq.s32.totalorder %s16, 2
    %p55 = por %p53, %p54
    %p56 = scmp.ne.s32.totalorder %s47, %s48
    %p57 = scmp.eq.s32.totalorder %s16, 0
    %p58 = por %p56, %p57
    %p59 = scmp.ne.s32.totalorder %s47, %s48
    %p60 = scmp.eq.s32.totalorder %s17, 2
    %p61 = por %p59, %p60
    %p63 = scmp.ne.s32.totalorder %s48, %s62
    %p64 = scmp.eq.s32.totalorder %s17, 0
    %p65 = por %p63, %p64
    %s67 = sadd.s32 %s66, 1
    %p70 = scmp.eq.s32.totalorder %s11, 2
    %p71 = scmp.ne.s32.totalorder %s66, %s68
    %p72 = scmp.eq.s32.totalorder %s11, 0
    %p73 = por %p71, %p72
    %p74 = scmp.ne.s32.totalorder %s66, %s68
    %p75 = scmp.eq.s32.totalorder %s16, 2
    %p76 = por %p74, %p75
    %p77 = scmp.ne.s32.totalorder %s68, %s69
    %p78 = scmp.eq.s32.totalorder %s16, 0
    %p79 = por %p77, %p78
    %p80 = scmp.ne.s32.totalorder %s68, %s69
    %p81 = scmp.eq.s32.totalorder %s17, 2
    %p82 = por %p80, %p81
    %p84 = scmp.ne.s32.totalorder %s69, %s83
    %p85 = scmp.eq.s32.totalorder %s17, 0
    %p86 = por %p84, %p85
    %s87 = ssub.s32 %s11, %s18
    %p88 = scmp.eq.s32.totalorder %s87, 0
    %s90 = sadd.s32 %s89, 1
    %s91 = scalar_select %p88, %s89, %s90
    %p94 = pneg %p88
    %p95 = scmp.eq.s32.totalorder %s11, 2
    %p96 = por %p94, %p95
    %p97 = scmp.ne.s32.totalorder %s89, %s92
    %p98 = scmp.eq.s32.totalorder %s11, 0
    %p99 = por %p97, %p98
    %p100 = scmp.ne.s32.totalorder %s89, %s92
    %p101 = scmp.eq.s32.totalorder %s16, 2
    %p102 = por %p100, %p101
    %p103 = scmp.ne.s32.totalorder %s92, %s93
    %p104 = scmp.eq.s32.totalorder %s16, 0
    %p105 = por %p103, %p104
    %p106 = scmp.ne.s32.totalorder %s92, %s93
    %p107 = scmp.eq.s32.totalorder %s17, 2
    %p108 = por %p106, %p107
    %p110 = scmp.ne.s32.totalorder %s93, %s109
    %p111 = scmp.eq.s32.totalorder %s17, 0
    %p112 = por %p110, %p111
    %s114 = sadd.s32 %s113, 1
    %p117 = scmp.eq.s32.totalorder %s11, 2
    %p118 = scmp.ne.s32.totalorder %s113, %s115
    %p119 = scmp.eq.s32.totalorder %s11, 0
    %p120 = por %p118, %p119
    %p121 = scmp.ne.s32.totalorder %s113, %s115
    %p122 = scmp.eq.s32.totalorder %s16, 2
    %p123 = por %p121, %p122
    %p124 = scmp.ne.s32.totalorder %s115, %s116
    %p125 = scmp.eq.s32.totalorder %s16, 0
    %p126 = por %p124, %p125
    %p127 = scmp.ne.s32.totalorder %s115, %s116
    %p128 = scmp.eq.s32.totalorder %s17, 2
    %p129 = por %p127, %p128
    %p131 = scmp.ne.s32.totalorder %s116, %s130
    %p132 = scmp.eq.s32.totalorder %s17, 0
    %p133 = por %p131, %p132
    %p134 = scmp.le.s32.totalorder 1, %s11
    %p135 = scmp.lt.s32.totalorder %s11, 4
    %p136 = pnand %p134, %p135
    %p137 = pneg %p136
    // Predicated region
    $region9: #{posblock_pallas.5} parent=5 // pred_check
      _
    $region10: #{posblock_pallas.5} parent=5 // pred_check_branch
      %139 = sbr.rel (%p136) target = $region12
    $region11: #{posblock_pallas.5} parent=5 // pred_region
      %s140 = ssub.s32 %s11, 1
      // Predicated region
      $region13: #{posblock_pallas.5} parent=11 // pred_check
        %p141 = pneg %p58
      $region14: #{posblock_pallas.5} parent=11 // pred_check_branch
        %143 = sbr.rel (%p141) target = $region16
      $region15: #{posblock_pallas.5} parent=11 // pred_region
        _
      $region16: #{posblock_pallas.5} parent=11 // pred_fallthru
        _
      // Predicated region
      $region17: #{posblock_pallas.5} parent=11 // pred_check
        %p144 = pneg %p79
      $region18: #{posblock_pallas.5} parent=11 // pred_check_branch
        %146 = sbr.rel (%p144) target = $region20
      $region19: #{posblock_pallas.5} parent=11 // pred_region
        _
      $region20: #{posblock_pallas.5} parent=11 // pred_fallthru
        _
    $region12: #{posblock_pallas.5} parent=5 // pred_fallthru
      _
    %p147 = scmp.lt.s32.totalorder %s11, 3
    // Predicated region
    $region21: #{posblock_pallas.5} parent=5 // pred_check
      %p148 = pneg %p147
    $region22: #{posblock_pallas.5} parent=5 // pred_check_branch
      %150 = sbr.rel (%p148) target = $region24
    $region23: #{posblock_pallas.5} parent=5 // pred_region
      // Predicated region
      $region25: #{posblock_pallas.5} parent=23 // pred_check
        %p151 = pneg %p31
      $region26: #{posblock_pallas.5} parent=23 // pred_check_branch
        %153 = sbr.rel (%p151) target = $region28
      $region27: #{posblock_pallas.5} parent=23 // pred_region
        %s154 = smul.u32 2, %s11
        %p155 = scmp.lt.s32.totalorder %s154, 5
        %s156 = scalar_select %p155, %s154, 5
        %s157 = smul.addr %s156, 8
        %s158 = scalar_lea.vmem %s0, %s157
        %s159 = smul.u32 2, %s11
      $region28: #{posblock_pallas.5} parent=23 // pred_fallthru
        _
    $region24: #{posblock_pallas.5} parent=5 // pred_fallthru
      _
    %p160 = scmp.le.s32.totalorder 1, %s11
    %p161 = scmp.lt.s32.totalorder %s11, 4
    %p162 = pnand %p160, %p161
    %p163 = pneg %p162
    // Predicated region
    $region29: #{posblock_pallas.5} parent=5 // pred_check
      _
    $region30: #{posblock_pallas.5} parent=5 // pred_check_branch
      %165 = sbr.rel (%p162) target = $region32
    $region31: #{posblock_pallas.5} parent=5 // pred_region
      %s166 = ssub.s32 %s11, 1
      %s167 = smul.u32 2, %s16
      %p168 = scmp.lt.s32.totalorder %s167, 5
      %s169 = scalar_select %p168, %s167, 5
      %s170 = smul.addr %s169, 8
      %s171 = scalar_lea.vmem %s0, %s170
      %p172 = pneg %p37
      %p173 = pneg %p34
      %p174 = pneg %p58
      %p175 = pneg %p55
      %p176 = pneg %p79
      %p177 = pneg %p76
      %p178 = pneg %p105
      %p179 = pneg %p102
      %s180 = smul.u32 2, %s16
      %p181 = scmp.lt.s32.totalorder %s180, 5
      %s182 = scalar_select %p181, %s180, 5
      %s183 = smul.addr %s182, 4
      %s184 = scalar_lea.vmem %s3, %s183
      %p185 = pneg %p126
      %p186 = pneg %p123
      %s187 = smul.u32 2, %s16
      %p188 = scmp.lt.s32.totalorder %s187, 5
      %s189 = scalar_select %p188, %s187, 5
      %s190 = smul.addr %s189, 8
      %s191 = scalar_lea.vmem %s0, %s190
      %s192 = smul.u32 2, %s16
      %s193 = smul.u32 2, %s16
      %p194 = scmp.lt.s32.totalorder %s193, 5
      %s195 = scalar_select %p194, %s193, 5
      %s196 = smul.addr %s195, 4
      %s197 = scalar_lea.vmem %s3, %s196
      %s198 = smul.u32 2, %s16
      %p200 = scmp.eq.s32.totalorder %s16, 0
      // Predicated region
      $region33: #{posblock_pallas.5} parent=31 // pred_check
        %p201 = pneg %p200
      $region34: #{posblock_pallas.5} parent=31 // pred_check_branch
        %203 = sbr.rel (%p201) target = $region36
      $region35: #{posblock_pallas.5} parent=31 // pred_region
        %204 = vst [vmem:[#allocation2] sm:$0x1] 0.0
        %205 = vst [vmem:[#allocation3] sm:$0x1] 0.0
      $region36: #{posblock_pallas.5} parent=31 // pred_fallthru
        _
      %v206 = vld [vmem:[%s191] sm:$0xff]
      %v207 = vld [vmem:[%s191 + $0x8] sm:$0xff]
      %v208 = vpack.c.bf16 %v207, %v206
      %v209 = vld [vmem:[%s1] sm:$0xf]
      %v210 = vld [vmem:[%s1 + $0x4] sm:$0xf]
      %v211 = vld [vmem:[%s1 + $0x8] sm:$0xf]
      %v212 = vld [vmem:[%s1 + $0xc] sm:$0xf]
      %v213 = vld [vmem:[%s1 + $0x10] sm:$0xf]
      %v214 = vld [vmem:[%s1 + $0x14] sm:$0xf]
      %v215 = vld [vmem:[%s1 + $0x18] sm:$0xf]
      %v216 = vld [vmem:[%s1 + $0x1c] sm:$0xf]
      %v217 = vld [vmem:[%s1 + $0x20] sm:$0xf]
      %v218 = vld [vmem:[%s1 + $0x24] sm:$0xf]
      %v219 = vld [vmem:[%s1 + $0x28] sm:$0xf]
      %v220 = vld [vmem:[%s1 + $0x2c] sm:$0xf]
      %v221 = vld [vmem:[%s1 + $0x30] sm:$0xf]
      %v222 = vld [vmem:[%s1 + $0x34] sm:$0xf]
      %v223 = vld [vmem:[%s1 + $0x38] sm:$0xf]
      %v224 = vld [vmem:[%s1 + $0x3c] sm:$0xf]
      %v241 = vunpack.c.l.b16 %v209
      %v242 = vunpack.c.l.b16 %v210
      %v243 = vunpack.c.l.b16 %v211
      %v244 = vunpack.c.l.b16 %v212
      %v245 = vunpack.c.l.b16 %v213
      %v246 = vunpack.c.l.b16 %v214
      %v247 = vunpack.c.l.b16 %v215
      %v248 = vunpack.c.l.b16 %v216
      %v249 = vunpack.c.l.b16 %v217
      %v250 = vunpack.c.l.b16 %v218
      %v251 = vunpack.c.l.b16 %v219
      %v252 = vunpack.c.l.b16 %v220
      %v253 = vunpack.c.l.b16 %v221
      %v254 = vunpack.c.l.b16 %v222
      %v255 = vunpack.c.l.b16 %v223
      %v256 = vunpack.c.l.b16 %v224
      %v257 = vpack.c.b16 %v242, %v241
      %v258 = vpack.c.b16 %v244, %v243
      %v259 = vpack.c.b16 %v246, %v245
      %v260 = vpack.c.b16 %v248, %v247
      %v261 = vpack.c.b16 %v250, %v249
      %v262 = vpack.c.b16 %v252, %v251
      %v263 = vpack.c.b16 %v254, %v253
      %v264 = vpack.c.b16 %v256, %v255
      %273 = vmatprep.subr.bf16.mxu0 0
      %274 = vmatpush1.bf16.msra.mxu0 %v257
      %275 = vmatprep.subr.bf16.mxu0 0
      %276 = vmatpush1.bf16.msra.mxu0 %v258
      %277 = vmatprep.subr.bf16.mxu0 0
      %278 = vmatpush1.bf16.msra.mxu0 %v259
      %279 = vmatprep.subr.bf16.mxu0 0
      %280 = vmatpush1.bf16.msra.mxu0 %v260
      %281 = vmatprep.subr.bf16.mxu0 0
      %282 = vmatpush1.bf16.msra.mxu0 %v261
      %283 = vmatprep.subr.bf16.mxu0 0
      %284 = vmatpush1.bf16.msra.mxu0 %v262
      %285 = vmatprep.subr.bf16.mxu0 0
      %286 = vmatpush1.bf16.msra.mxu0 %v263
      %287 = vmatprep.subr.bf16.mxu0 0
      %288 = vmatpush1.bf16.msra.mxu0 %v264
      %289 = vmatprep.subr.bf16.mxu0 0
      %290 = vmatpush1.bf16.msra.mxu0 0
      %291 = vmatprep.subr.bf16.mxu0 0
      %292 = vmatpush1.bf16.msra.mxu0 0
      %293 = vmatprep.subr.bf16.mxu0 0
      %294 = vmatpush1.bf16.msra.mxu0 0
      %295 = vmatprep.subr.bf16.mxu0 0
      %296 = vmatpush1.bf16.msra.mxu0 0
      %297 = vmatprep.subr.bf16.mxu0 0
      %298 = vmatpush1.bf16.msra.mxu0 0
      %299 = vmatprep.subr.bf16.mxu0 0
      %300 = vmatpush1.bf16.msra.mxu0 0
      %301 = vmatprep.subr.bf16.mxu0 0
      %302 = vmatpush1.bf16.msra.mxu0 0
      %303 = vmatprep.subr.bf16.mxu0 0
      %304 = vmatpush1.bf16.msra.mxu0 0
      %305 = vmatprep.mubr.bf16.mxu0 0
      %306 = vmatmul.mubr.bf16.gmra.mrb[0].mxu0 %v208
      %v307 = vpop.f32.mrb[0].mxu0
      %v308 = vadd.f32 0.0, %v307
      %v309 = vpop.f32.mrb[0].mxu0
      %v310 = vpop.f32.mrb[0].mxu0
      %v311 = vadd.f32 0.0, %v310
      %v312 = vpop.f32.mrb[0].mxu0
      %313 = vdwg.mxu0
      %v314 = vpack.c.bf16 %v311, %v308
      %v316 = vunpack.c.l.b16 %v314
      %v317 = vunpack.c.h.b16 %v314
      %v318 = vpack.c.b16 %v316, %v316
      %v319 = vpack.c.b16 %v317, %v317
      %322 = vst [vmem:[%s197] sm:$0xf] %v318
      %323 = vst [vmem:[%s197 + $0x4] sm:$0xf] %v319
      %v324 = vunpack.c.l.bf16 %v314
      %v325 = vunpack.c.h.bf16 %v314
      %v326 = vld [vmem:[#allocation2] sm:$0x1]
      %v327 = vadd.f32 %v324, %v325
      %v328 = vrot.slane %v327, 4
      %v329 = vadd.f32 %v327, %v328
      %v330 = vrot.slane %v329, 2
      %v331 = vadd.f32 %v329, %v330
      %v332 = vrot.slane %v331, 1
      %v333 = vadd.f32 %v331, %v332
      %v334 = vadd.f32 %v326, %v333
      %335 = vst [vmem:[#allocation2] sm:$0x1] %v334
      %v336 = vld [vmem:[#allocation3] sm:$0x1]
      %v337 = vmul.f32 %v324, %v324
      %v338 = vmul.f32 %v325, %v325
      %v339 = vadd.f32 %v337, %v338
      %v340 = vrot.slane %v339, 4
      %v341 = vadd.f32 %v339, %v340
      %v342 = vrot.slane %v341, 2
      %v343 = vadd.f32 %v341, %v342
      %v344 = vrot.slane %v343, 1
      %v345 = vadd.f32 %v343, %v344
      %v346 = vadd.f32 %v336, %v345
      %347 = vst [vmem:[#allocation3] sm:$0x1] %v346
      %p348 = scmp.eq.s32.totalorder %s16, 2
      // Predicated region
      $region37: #{posblock_pallas.5} parent=31 // pred_check
        %p349 = pneg %p348
      $region38: #{posblock_pallas.5} parent=31 // pred_check_branch
        %351 = sbr.rel (%p349) target = $region40
      $region39: #{posblock_pallas.5} parent=31 // pred_region
        %v352 = vld [vmem:[#allocation2] sm:$0x1]
        %v353 = vmul.f32 %v352, 0.025
        %v354 = vld [vmem:[#allocation3] sm:$0x1]
        %v355 = vmul.f32 %v354, 0.025
        %v356 = vmul.f32 %v353, %v353
        %v357 = vsub.f32 %v355, %v356
        %v358 = vmax.f32 %v357, 0.0
        %v359 = vld [vmem:[%s2] sm:$0x1]
        %v360 = vadd.f32 %v358, 1e-05
        %v361 = vrsqrt.pop %v360
        %v362 = vmul.f32 %v359, %v361
        %363 = vst [vmem:[%s4] sm:$0x1] %v362
        %v364 = vld [vmem:[%s2 + $0x1] sm:$0x1]
        %v365 = vmul.f32 %v353, %v362
        %v366 = vsub.f32 %v364, %v365
        %367 = vst [vmem:[%s4 + $0x1] sm:$0x1] %v366
      $region40: #{posblock_pallas.5} parent=31 // pred_fallthru
        _
      %s368 = smul.u32 2, %s16
      %p369 = scmp.lt.s32.totalorder %s368, 5
      %s370 = scalar_select %p369, %s368, 5
      %s371 = smul.addr %s370, 4
      %s372 = scalar_lea.vmem %s3, %s371
      // Predicated region
      $region41: #{posblock_pallas.5} parent=31 // pred_check
        %p373 = pneg %p102
      $region42: #{posblock_pallas.5} parent=31 // pred_check_branch
        %375 = sbr.rel (%p373) target = $region44
      $region43: #{posblock_pallas.5} parent=31 // pred_region
        %s376 = smul.u32 2, %s16
      $region44: #{posblock_pallas.5} parent=31 // pred_fallthru
        _
      // Predicated region
      $region45: #{posblock_pallas.5} parent=31 // pred_check
        %p377 = pneg %p123
      $region46: #{posblock_pallas.5} parent=31 // pred_check_branch
        %379 = sbr.rel (%p377) target = $region48
      $region47: #{posblock_pallas.5} parent=31 // pred_region
        _
      $region48: #{posblock_pallas.5} parent=31 // pred_fallthru
        _
      // Predicated region
      $region49: #{posblock_pallas.5} parent=31 // pred_check
        %p380 = pneg %p123
      $region50: #{posblock_pallas.5} parent=31 // pred_check_branch
        %382 = sbr.rel (%p380) target = $region52
      $region51: #{posblock_pallas.5} parent=31 // pred_region
        _
      $region52: #{posblock_pallas.5} parent=31 // pred_fallthru
        _
    $region32: #{posblock_pallas.5} parent=5 // pred_fallthru
      _
    %p383 = scmp.le.s32.totalorder 2, %s11
    // Predicated region
    $region53: #{posblock_pallas.5} parent=5 // pred_check
      %p384 = pneg %p383
    $region54: #{posblock_pallas.5} parent=5 // pred_check_branch
      %386 = sbr.rel (%p384) target = $region56
    $region55: #{posblock_pallas.5} parent=5 // pred_region
      %s387 = ssub.s32 %s11, 2
      // Predicated region
      $region57: #{posblock_pallas.5} parent=55 // pred_check
        %p388 = pneg %p108
      $region58: #{posblock_pallas.5} parent=55 // pred_check_branch
        %390 = sbr.rel (%p388) target = $region60
      $region59: #{posblock_pallas.5} parent=55 // pred_region
        %s391 = smul.u32 2, %s17
        %p392 = scmp.lt.s32.totalorder %s391, 5
        %s393 = scalar_select %p392, %s391, 5
        %s394 = smul.addr %s393, 4
        %s395 = scalar_lea.vmem %s3, %s394
      $region60: #{posblock_pallas.5} parent=55 // pred_fallthru
        _
    $region56: #{posblock_pallas.5} parent=5 // pred_fallthru
      _
  $region6: #{posblock_pallas.5} parent=0 // loop_footer
    %s15 = sadd.s32 1, %s11
  $region7: #{posblock_pallas.5} parent=0 // loop_footer_branch
    %10 = sbr.rel target = $region3
  $region8: #{posblock_pallas.5} parent=0 // loop_exit
    _

// kernel: posblock_pallas.6
$region0: #{posblock_pallas.6}
  #allocation0 [shape = 'u32[]', space=smem, size = 0x4, offset = 0x4, fixed_abs, tag = 'smem constant byte address 0x4 - core index']
  #allocation1 [shape = 'u32[144,128]{1,0:T(1,128)}', space=vmem, size = 0x12000, scoped, tag = 'internal scratch']
  #allocation2 [shape = 'f32[1,128]{1,0:T(1,128)}', space=vmem, size = 0x200, scoped, tag = 'scratch operand']
  #allocation3 [shape = 'f32[1,128]{1,0:T(1,128)}', space=vmem, size = 0x200, scoped, tag = 'scratch operand']
  %s0 = inlined_call_operand.vmem [shape: bf16[48,128], index: 0, kind: input, shape index: {}]
  %s1 = inlined_call_operand.vmem [shape: f32[2,128], index: 1, kind: input, shape index: {}]
  %s2 = inlined_call_operand.vmem [shape: f32[2,128], index: 2, kind: input, shape index: {}]
  %s3 = inlined_call_operand.vmem [shape: bf16[128,128], index: 3, kind: input, shape index: {}]
  %s4 = inlined_call_operand.vmem [shape: f32[48,128], index: 4, kind: output, shape index: {0}]
  %s5 = inlined_call_operand.vmem [shape: f32[2,128], index: 5, kind: output, shape index: {1}]
  %6 = xla_tuple %s4, %s5
  %s7 = sld [smem:[#allocation0]]
  $region69: #{posblock_pallas.6} parent=0
    _
  %s9 = ssub.s32 1, %s7
  %s10 = scalar_select 0, %s9, %s7
  loop: start=0, step=1, limit=5
  $region2: #{posblock_pallas.6} parent=0 // loop_pre_header
    _
  $region3: #{posblock_pallas.6} parent=0 // loop_header
    %s12 = sphi 0, %s16
    %p13 = scmp.ge.s32.totalorder %s12, 5
    %s22 = sphi 0, %s24
    %s25 = sphi 0, %s22
    %s26 = sphi 0, %s25
    %s42 = sphi 0, %s26
    %s46 = sphi 0, %s46
    %s48 = sphi 0, %s46
    %s49 = sphi 0, %s48
    %s63 = sphi 0, %s49
    %s67 = sphi 0, %s67
    %s69 = sphi 0, %s67
    %s70 = sphi 0, %s69
    %s84 = sphi 0, %s70
    %s88 = sphi 0, %s88
    %s90 = sphi 0, %s88
    %s91 = sphi 0, %s90
    %s105 = sphi 0, %s91
    %s111 = sphi 0, %s113
    %s114 = sphi 0, %s111
    %s115 = sphi 0, %s114
    %s131 = sphi 0, %s115
    %s135 = sphi 0, %s135
    %s137 = sphi 0, %s135
    %s138 = sphi 0, %s137
    %s152 = sphi 0, %s138
  $region4: #{posblock_pallas.6} parent=0 // loop_header_branch
    %15 = sbr.rel (%p13) target = $region8
  $region5: #{posblock_pallas.6} parent=0 // loop_body
    %s17 = ssub.s32 %s12, 1
    %s18 = ssub.s32 %s12, 2
    %s19 = sadd.s32 %s12, 1
    %s20 = ssub.s32 %s12, %s19
    %p21 = scmp.eq.s32.totalorder %s20, 0
    %s23 = sadd.s32 %s22, 1
    %s24 = scalar_select %p21, %s22, %s23
    %p27 = pneg %p21
    %p28 = scmp.eq.s32.totalorder %s12, 2
    %p29 = por %p27, %p28
    %p30 = scmp.ne.s32.totalorder %s22, %s25
    %p31 = scmp.eq.s32.totalorder %s12, 0
    %p32 = por %p30, %p31
    %p33 = scmp.ne.s32.totalorder %s22, %s25
    %p34 = scmp.eq.s32.totalorder %s17, 2
    %p35 = por %p33, %p34
    %p36 = scmp.ne.s32.totalorder %s25, %s26
    %p37 = scmp.eq.s32.totalorder %s17, 0
    %p38 = por %p36, %p37
    %p39 = scmp.ne.s32.totalorder %s25, %s26
    %p40 = scmp.eq.s32.totalorder %s18, 2
    %p41 = por %p39, %p40
    %p43 = scmp.ne.s32.totalorder %s26, %s42
    %p44 = scmp.eq.s32.totalorder %s18, 0
    %p45 = por %p43, %p44
    %s47 = sadd.s32 %s46, 1
    %p50 = scmp.eq.s32.totalorder %s12, 2
    %p51 = scmp.ne.s32.totalorder %s46, %s48
    %p52 = scmp.eq.s32.totalorder %s12, 0
    %p53 = por %p51, %p52
    %p54 = scmp.ne.s32.totalorder %s46, %s48
    %p55 = scmp.eq.s32.totalorder %s17, 2
    %p56 = por %p54, %p55
    %p57 = scmp.ne.s32.totalorder %s48, %s49
    %p58 = scmp.eq.s32.totalorder %s17, 0
    %p59 = por %p57, %p58
    %p60 = scmp.ne.s32.totalorder %s48, %s49
    %p61 = scmp.eq.s32.totalorder %s18, 2
    %p62 = por %p60, %p61
    %p64 = scmp.ne.s32.totalorder %s49, %s63
    %p65 = scmp.eq.s32.totalorder %s18, 0
    %p66 = por %p64, %p65
    %s68 = sadd.s32 %s67, 1
    %p71 = scmp.eq.s32.totalorder %s12, 2
    %p72 = scmp.ne.s32.totalorder %s67, %s69
    %p73 = scmp.eq.s32.totalorder %s12, 0
    %p74 = por %p72, %p73
    %p75 = scmp.ne.s32.totalorder %s67, %s69
    %p76 = scmp.eq.s32.totalorder %s17, 2
    %p77 = por %p75, %p76
    %p78 = scmp.ne.s32.totalorder %s69, %s70
    %p79 = scmp.eq.s32.totalorder %s17, 0
    %p80 = por %p78, %p79
    %p81 = scmp.ne.s32.totalorder %s69, %s70
    %p82 = scmp.eq.s32.totalorder %s18, 2
    %p83 = por %p81, %p82
    %p85 = scmp.ne.s32.totalorder %s70, %s84
    %p86 = scmp.eq.s32.totalorder %s18, 0
    %p87 = por %p85, %p86
    %s89 = sadd.s32 %s88, 1
    %p92 = scmp.eq.s32.totalorder %s12, 2
    %p93 = scmp.ne.s32.totalorder %s88, %s90
    %p94 = scmp.eq.s32.totalorder %s12, 0
    %p95 = por %p93, %p94
    %p96 = scmp.ne.s32.totalorder %s88, %s90
    %p97 = scmp.eq.s32.totalorder %s17, 2
    %p98 = por %p96, %p97
    %p99 = scmp.ne.s32.totalorder %s90, %s91
    %p100 = scmp.eq.s32.totalorder %s17, 0
    %p101 = por %p99, %p100
    %p102 = scmp.ne.s32.totalorder %s90, %s91
    %p103 = scmp.eq.s32.totalorder %s18, 2
    %p104 = por %p102, %p103
    %p106 = scmp.ne.s32.totalorder %s91, %s105
    %p107 = scmp.eq.s32.totalorder %s18, 0
    %p108 = por %p106, %p107
    %s109 = ssub.s32 %s12, %s19
    %p110 = scmp.eq.s32.totalorder %s109, 0
    %s112 = sadd.s32 %s111, 1
    %s113 = scalar_select %p110, %s111, %s112
    %p116 = pneg %p110
    %p117 = scmp.eq.s32.totalorder %s12, 2
    %p118 = por %p116, %p117
    %p119 = scmp.ne.s32.totalorder %s111, %s114
    %p120 = scmp.eq.s32.totalorder %s12, 0
    %p121 = por %p119, %p120
    %p122 = scmp.ne.s32.totalorder %s111, %s114
    %p123 = scmp.eq.s32.totalorder %s17, 2
    %p124 = por %p122, %p123
    %p125 = scmp.ne.s32.totalorder %s114, %s115
    %p126 = scmp.eq.s32.totalorder %s17, 0
    %p127 = por %p125, %p126
    %p128 = scmp.ne.s32.totalorder %s114, %s115
    %p129 = scmp.eq.s32.totalorder %s18, 2
    %p130 = por %p128, %p129
    %p132 = scmp.ne.s32.totalorder %s115, %s131
    %p133 = scmp.eq.s32.totalorder %s18, 0
    %p134 = por %p132, %p133
    %s136 = sadd.s32 %s135, 1
    %p139 = scmp.eq.s32.totalorder %s12, 2
    %p140 = scmp.ne.s32.totalorder %s135, %s137
    %p141 = scmp.eq.s32.totalorder %s12, 0
    %p142 = por %p140, %p141
    %p143 = scmp.ne.s32.totalorder %s135, %s137
    %p144 = scmp.eq.s32.totalorder %s17, 2
    %p145 = por %p143, %p144
    %p146 = scmp.ne.s32.totalorder %s137, %s138
    %p147 = scmp.eq.s32.totalorder %s17, 0
    %p148 = por %p146, %p147
    %p149 = scmp.ne.s32.totalorder %s137, %s138
    %p150 = scmp.eq.s32.totalorder %s18, 2
    %p151 = por %p149, %p150
    %p153 = scmp.ne.s32.totalorder %s138, %s152
    %p154 = scmp.eq.s32.totalorder %s18, 0
    %p155 = por %p153, %p154
    %p156 = scmp.le.s32.totalorder 1, %s12
    %p157 = scmp.lt.s32.totalorder %s12, 4
    %p158 = pnand %p156, %p157
    %p159 = pneg %p158
    // Predicated region
    $region9: #{posblock_pallas.6} parent=5 // pred_check
      _
    $region10: #{posblock_pallas.6} parent=5 // pred_check_branch
      %161 = sbr.rel (%p158) target = $region12
    $region11: #{posblock_pallas.6} parent=5 // pred_region
      %s162 = ssub.s32 %s12, 1
      // Predicated region
      $region13: #{posblock_pallas.6} parent=11 // pred_check
        %p163 = pneg %p59
      $region14: #{posblock_pallas.6} parent=11 // pred_check_branch
        %165 = sbr.rel (%p163) target = $region16
      $region15: #{posblock_pallas.6} parent=11 // pred_region
        _
      $region16: #{posblock_pallas.6} parent=11 // pred_fallthru
        _
      // Predicated region
      $region17: #{posblock_pallas.6} parent=11 // pred_check
        %p166 = pneg %p80
      $region18: #{posblock_pallas.6} parent=11 // pred_check_branch
        %168 = sbr.rel (%p166) target = $region20
      $region19: #{posblock_pallas.6} parent=11 // pred_region
        _
      $region20: #{posblock_pallas.6} parent=11 // pred_fallthru
        _
      // Predicated region
      $region21: #{posblock_pallas.6} parent=11 // pred_check
        %p169 = pneg %p101
      $region22: #{posblock_pallas.6} parent=11 // pred_check_branch
        %171 = sbr.rel (%p169) target = $region24
      $region23: #{posblock_pallas.6} parent=11 // pred_region
        _
      $region24: #{posblock_pallas.6} parent=11 // pred_fallthru
        _
    $region12: #{posblock_pallas.6} parent=5 // pred_fallthru
      _
    %p172 = scmp.lt.s32.totalorder %s12, 3
    // Predicated region
    $region25: #{posblock_pallas.6} parent=5 // pred_check
      %p173 = pneg %p172
    $region26: #{posblock_pallas.6} parent=5 // pred_check_branch
      %175 = sbr.rel (%p173) target = $region28
    $region27: #{posblock_pallas.6} parent=5 // pred_region
      // Predicated region
      $region29: #{posblock_pallas.6} parent=27 // pred_check
        %p176 = pneg %p32
      $region30: #{posblock_pallas.6} parent=27 // pred_check_branch
        %178 = sbr.rel (%p176) target = $region32
      $region31: #{posblock_pallas.6} parent=27 // pred_region
        %s179 = smul.u32 2, %s12
        %p180 = scmp.lt.s32.totalorder %s179, 5
        %s181 = scalar_select %p180, %s179, 5
        %s182 = smul.addr %s181, 4
        %s183 = scalar_lea.vmem %s0, %s182
        %s184 = smul.u32 2, %s12
      $region32: #{posblock_pallas.6} parent=27 // pred_fallthru
        _
    $region28: #{posblock_pallas.6} parent=5 // pred_fallthru
      _
    %p185 = scmp.le.s32.totalorder 1, %s12
    %p186 = scmp.lt.s32.totalorder %s12, 4
    %p187 = pnand %p185, %p186
    %p188 = pneg %p187
    // Predicated region
    $region33: #{posblock_pallas.6} parent=5 // pred_check
      _
    $region34: #{posblock_pallas.6} parent=5 // pred_check_branch
      %190 = sbr.rel (%p187) target = $region36
    $region35: #{posblock_pallas.6} parent=5 // pred_region
      %s191 = ssub.s32 %s12, 1
      %s192 = smul.u32 2, %s17
      %p193 = scmp.lt.s32.totalorder %s192, 5
      %s194 = scalar_select %p193, %s192, 5
      %s195 = smul.addr %s194, 4
      %s196 = scalar_lea.vmem %s0, %s195
      %p197 = pneg %p38
      %p198 = pneg %p35
      %p199 = pneg %p59
      %p200 = pneg %p56
      %p201 = pneg %p80
      %p202 = pneg %p77
      %p203 = pneg %p101
      %p204 = pneg %p98
      %p205 = pneg %p127
      %p206 = pneg %p124
      %s207 = smul.u32 2, %s17
      %p208 = scmp.lt.s32.totalorder %s207, 5
      %s209 = scalar_select %p208, %s207, 5
      %s210 = smul.addr %s209, 8
      %s211 = scalar_lea.vmem %s4, %s210
      %p212 = pneg %p148
      %p213 = pneg %p145
      %s214 = smul.u32 2, %s17
      %p215 = scmp.lt.s32.totalorder %s214, 5
      %s216 = scalar_select %p215, %s214, 5
      %s217 = smul.addr %s216, 4
      %s218 = scalar_lea.vmem %s0, %s217
      %s219 = smul.u32 2, %s17
      %s220 = smul.u32 2, %s17
      %p221 = scmp.lt.s32.totalorder %s220, 5
      %s222 = scalar_select %p221, %s220, 5
      %s223 = smul.addr %s222, 8
      %s224 = scalar_lea.vmem %s4, %s223
      %s225 = smul.u32 2, %s17
      %p227 = scmp.eq.s32.totalorder %s17, 0
      // Predicated region
      $region37: #{posblock_pallas.6} parent=35 // pred_check
        %p228 = pneg %p227
      $region38: #{posblock_pallas.6} parent=35 // pred_check_branch
        %230 = sbr.rel (%p228) target = $region40
      $region39: #{posblock_pallas.6} parent=35 // pred_region
        %231 = vst [vmem:[#allocation2] sm:$0x1] 0.0
        %232 = vst [vmem:[#allocation3] sm:$0x1] 0.0
      $region40: #{posblock_pallas.6} parent=35 // pred_fallthru
        _
      %v233 = vld [vmem:[%s218] sm:$0xf]
      %v234 = vld [vmem:[%s218 + $0x4] sm:$0xf]
      %v235 = vunpack.c.l.bf16 %v233
      %v236 = vunpack.c.l.bf16 %v234
      %v237 = vld [vmem:[%s1] sm:$0x1]
      %v238 = vlaneseq
      %v239 = vshrl.u32 %v238, 7
      %v240 = vsub.s32 0, %v239
      %v241 = vrot.slane %v237, %v240
      %v242 = vmul.f32 %v235, %v241
      %v243 = vmul.f32 %v236, %v241
      %v244 = vld [vmem:[%s1 + $0x1] sm:$0x1]
      %v245 = vlaneseq
      %v246 = vshrl.u32 %v245, 7
      %v247 = vsub.s32 0, %v246
      %v248 = vrot.slane %v244, %v247
      %v249 = vadd.f32 %v242, %v248
      %v250 = vadd.f32 %v243, %v248
      %v251 = vmax.f32 %v249, 0.0
      %v252 = vmax.f32 %v250, 0.0
      %v253 = vpack.c.bf16 %v252, %v251
      %v254 = vld [vmem:[%s3] sm:$0xf]
      %v255 = vld [vmem:[%s3 + $0x4] sm:$0xf]
      %v256 = vld [vmem:[%s3 + $0x8] sm:$0xf]
      %v257 = vld [vmem:[%s3 + $0xc] sm:$0xf]
      %v258 = vld [vmem:[%s3 + $0x10] sm:$0xf]
      %v259 = vld [vmem:[%s3 + $0x14] sm:$0xf]
      %v260 = vld [vmem:[%s3 + $0x18] sm:$0xf]
      %v261 = vld [vmem:[%s3 + $0x1c] sm:$0xf]
      %v262 = vld [vmem:[%s3 + $0x20] sm:$0xf]
      %v263 = vld [vmem:[%s3 + $0x24] sm:$0xf]
      %v264 = vld [vmem:[%s3 + $0x28] sm:$0xf]
      %v265 = vld [vmem:[%s3 + $0x2c] sm:$0xf]
      %v266 = vld [vmem:[%s3 + $0x30] sm:$0xf]
      %v267 = vld [vmem:[%s3 + $0x34] sm:$0xf]
      %v268 = vld [vmem:[%s3 + $0x38] sm:$0xf]
      %v269 = vld [vmem:[%s3 + $0x3c] sm:$0xf]
      %v286 = vunpack.c.l.b16 %v254
      %v287 = vunpack.c.l.b16 %v255
      %v288 = vunpack.c.l.b16 %v256
      %v289 = vunpack.c.l.b16 %v257
      %v290 = vunpack.c.l.b16 %v258
      %v291 = vunpack.c.l.b16 %v259
      %v292 = vunpack.c.l.b16 %v260
      %v293 = vunpack.c.l.b16 %v261
      %v294 = vunpack.c.l.b16 %v262
      %v295 = vunpack.c.l.b16 %v263
      %v296 = vunpack.c.l.b16 %v264
      %v297 = vunpack.c.l.b16 %v265
      %v298 = vunpack.c.l.b16 %v266
      %v299 = vunpack.c.l.b16 %v267
      %v300 = vunpack.c.l.b16 %v268
      %v301 = vunpack.c.l.b16 %v269
      %v302 = vpack.c.b16 %v287, %v286
      %v303 = vpack.c.b16 %v289, %v288
      %v304 = vpack.c.b16 %v291, %v290
      %v305 = vpack.c.b16 %v293, %v292
      %v306 = vpack.c.b16 %v295, %v294
      %v307 = vpack.c.b16 %v297, %v296
      %v308 = vpack.c.b16 %v299, %v298
      %v309 = vpack.c.b16 %v301, %v300
      %318 = vmatprep.subr.bf16.mxu0 0
      %319 = vmatpush1.bf16.msra.mxu0 %v302
      %320 = vmatprep.subr.bf16.mxu0 0
      %321 = vmatpush1.bf16.msra.mxu0 %v303
      %322 = vmatprep.subr.bf16.mxu0 0
      %323 = vmatpush1.bf16.msra.mxu0 %v304
      %324 = vmatprep.subr.bf16.mxu0 0
      %325 = vmatpush1.bf16.msra.mxu0 %v305
      %326 = vmatprep.subr.bf16.mxu0 0
      %327 = vmatpush1.bf16.msra.mxu0 %v306
      %328 = vmatprep.subr.bf16.mxu0 0
      %329 = vmatpush1.bf16.msra.mxu0 %v307
      %330 = vmatprep.subr.bf16.mxu0 0
      %331 = vmatpush1.bf16.msra.mxu0 %v308
      %332 = vmatprep.subr.bf16.mxu0 0
      %333 = vmatpush1.bf16.msra.mxu0 %v309
      %334 = vmatprep.subr.bf16.mxu0 0
      %335 = vmatpush1.bf16.msra.mxu0 0
      %336 = vmatprep.subr.bf16.mxu0 0
      %337 = vmatpush1.bf16.msra.mxu0 0
      %338 = vmatprep.subr.bf16.mxu0 0
      %339 = vmatpush1.bf16.msra.mxu0 0
      %340 = vmatprep.subr.bf16.mxu0 0
      %341 = vmatpush1.bf16.msra.mxu0 0
      %342 = vmatprep.subr.bf16.mxu0 0
      %343 = vmatpush1.bf16.msra.mxu0 0
      %344 = vmatprep.subr.bf16.mxu0 0
      %345 = vmatpush1.bf16.msra.mxu0 0
      %346 = vmatprep.subr.bf16.mxu0 0
      %347 = vmatpush1.bf16.msra.mxu0 0
      %348 = vmatprep.subr.bf16.mxu0 0
      %349 = vmatpush1.bf16.msra.mxu0 0
      %350 = vmatprep.mubr.bf16.mxu0 0
      %351 = vmatmul.mubr.bf16.gmra.mrb[0].mxu0 %v253
      %v352 = vpop.f32.mrb[0].mxu0
      %v353 = vadd.f32 0.0, %v352
      %v354 = vpop.f32.mrb[0].mxu0
      %v355 = vpop.f32.mrb[0].mxu0
      %v356 = vadd.f32 0.0, %v355
      %v357 = vpop.f32.mrb[0].mxu0
      %358 = vdwg.mxu0
      %359 = vst [vmem:[%s224] sm:$0xff] %v353
      %360 = vst [vmem:[%s224 + $0x8] sm:$0xff] %v356
      %p361 = scmp.lt.s32.totalorder %s17, 2
      // Predicated region
      $region41: #{posblock_pallas.6} parent=35 // pred_check
        %p362 = pneg %p361
      $region42: #{posblock_pallas.6} parent=35 // pred_check_branch
        %364 = sbr.rel (%p362) target = $region44
      $region43: #{posblock_pallas.6} parent=35 // pred_region
        %v365 = vld [vmem:[#allocation2] sm:$0x1]
        %v366 = vadd.f32 %v353, %v356
        %v367 = vrot.slane %v366, 4
        %v368 = vadd.f32 %v366, %v367
        %v369 = vrot.slane %v368, 2
        %v370 = vadd.f32 %v368, %v369
        %v371 = vrot.slane %v370, 1
        %v372 = vadd.f32 %v370, %v371
        %v373 = vadd.f32 %v365, %v372
        %374 = vst [vmem:[#allocation2] sm:$0x1] %v373
        %v375 = vld [vmem:[#allocation3] sm:$0x1]
        %v376 = vmul.f32 %v353, %v353
        %v377 = vmul.f32 %v356, %v356
        %v378 = vadd.f32 %v376, %v377
        %v379 = vrot.slane %v378, 4
        %v380 = vadd.f32 %v378, %v379
        %v381 = vrot.slane %v380, 2
        %v382 = vadd.f32 %v380, %v381
        %v383 = vrot.slane %v382, 1
        %v384 = vadd.f32 %v382, %v383
        %v385 = vadd.f32 %v375, %v384
        %386 = vst [vmem:[#allocation3] sm:$0x1] %v385
      $region44: #{posblock_pallas.6} parent=35 // pred_fallthru
        _
      %p387 = scmp.eq.s32.totalorder %s17, 2
      // Predicated region
      $region45: #{posblock_pallas.6} parent=35 // pred_check
        %p388 = pneg %p387
      $region46: #{posblock_pallas.6} parent=35 // pred_check_branch
        %390 = sbr.rel (%p388) target = $region48
      $region47: #{posblock_pallas.6} parent=35 // pred_region
        %s391 = smul.u32 %s17, 16
        %v392 = vlaneseq
        %v393 = vshrl.u32 %v392, 7
        %v394 = vadd.s32 %v393, 8
        %v395 = vstv %s391
        %v396 = vadd.s32 %v395, %v393
        %v397 = vadd.s32 %v395, %v394
        %vm398 = vcmp.lt.s32.totalorder %v396, 40
        %vm399 = vcmp.lt.s32.totalorder %v397, 40
        %v400 = vsel %vm398, 1, 0
        %v401 = vsel %vm399, 1, 0
        %vm402 = vcmp.eq.s32.totalorder %v400, 1
        %vm403 = vcmp.eq.s32.totalorder %v401, 1
        %v404 = vsel %vm402, %v353, 0.0
        %v405 = vsel %vm403, %v356, 0.0
        %v406 = vld [vmem:[#allocation2] sm:$0x1]
        %v407 = vadd.f32 %v404, %v405
        %v408 = vrot.slane %v407, 4
        %v409 = vadd.f32 %v407, %v408
        %v410 = vrot.slane %v409, 2
        %v411 = vadd.f32 %v409, %v410
        %v412 = vrot.slane %v411, 1
        %v413 = vadd.f32 %v411, %v412
        %v414 = vadd.f32 %v406, %v413
        %415 = vst [vmem:[#allocation2] sm:$0x1] %v414
        %v416 = vld [vmem:[#allocation3] sm:$0x1]
        %v417 = vmul.f32 %v404, %v404
        %v418 = vmul.f32 %v405, %v405
        %v419 = vadd.f32 %v417, %v418
        %v420 = vrot.slane %v419, 4
        %v421 = vadd.f32 %v419, %v420
        %v422 = vrot.slane %v421, 2
        %v423 = vadd.f32 %v421, %v422
        %v424 = vrot.slane %v423, 1
        %v425 = vadd.f32 %v423, %v424
        %v426 = vadd.f32 %v416, %v425
        %427 = vst [vmem:[#allocation3] sm:$0x1] %v426
        %v428 = vld [vmem:[#allocation2] sm:$0x1]
        %v429 = vmul.f32 %v428, 0.025
        %v430 = vld [vmem:[#allocation3] sm:$0x1]
        %v431 = vmul.f32 %v430, 0.025
        %v432 = vmul.f32 %v429, %v429
        %v433 = vsub.f32 %v431, %v432
        %v434 = vmax.f32 %v433, 0.0
        %v435 = vld [vmem:[%s2] sm:$0x1]
        %v436 = vadd.f32 %v434, 1e-05
        %v437 = vrsqrt.pop %v436
        %v438 = vmul.f32 %v435, %v437
        %439 = vst [vmem:[%s5] sm:$0x1] %v438
        %v440 = vld [vmem:[%s2 + $0x1] sm:$0x1]
        %v441 = vmul.f32 %v429, %v438
        %v442 = vsub.f32 %v440, %v441
        %443 = vst [vmem:[%s5 + $0x1] sm:$0x1] %v442
      $region48: #{posblock_pallas.6} parent=35 // pred_fallthru
        _
      %s444 = smul.u32 2, %s17
      %p445 = scmp.lt.s32.totalorder %s444, 5
      %s446 = scalar_select %p445, %s444, 5
      %s447 = smul.addr %s446, 8
      %s448 = scalar_lea.vmem %s4, %s447
      // Predicated region
      $region49: #{posblock_pallas.6} parent=35 // pred_check
        %p449 = pneg %p124
      $region50: #{posblock_pallas.6} parent=35 // pred_check_branch
        %451 = sbr.rel (%p449) target = $region52
      $region51: #{posblock_pallas.6} parent=35 // pred_region
        %s452 = smul.u32 2, %s17
      $region52: #{posblock_pallas.6} parent=35 // pred_fallthru
        _
      // Predicated region
      $region53: #{posblock_pallas.6} parent=35 // pred_check
        %p453 = pneg %p145
      $region54: #{posblock_pallas.6} parent=35 // pred_check_branch
        %455 = sbr.rel (%p453) target = $region56
      $region55: #{posblock_pallas.6} parent=35 // pred_region
        _
      $region56: #{posblock_pallas.6} parent=35 // pred_fallthru
        _
      // Predicated region
      $region57: #{posblock_pallas.6} parent=35 // pred_check
        %p456 = pneg %p145
      $region58: #{posblock_pallas.6} parent=35 // pred_check_branch
        %458 = sbr.rel (%p456) target = $region60
      $region59: #{posblock_pallas.6} parent=35 // pred_region
        _
      $region60: #{posblock_pallas.6} parent=35 // pred_fallthru
        _
    $region36: #{posblock_pallas.6} parent=5 // pred_fallthru
      _
    %p459 = scmp.le.s32.totalorder 2, %s12
    // Predicated region
    $region61: #{posblock_pallas.6} parent=5 // pred_check
      %p460 = pneg %p459
    $region62: #{posblock_pallas.6} parent=5 // pred_check_branch
      %462 = sbr.rel (%p460) target = $region64
    $region63: #{posblock_pallas.6} parent=5 // pred_region
      %s463 = ssub.s32 %s12, 2
      // Predicated region
      $region65: #{posblock_pallas.6} parent=63 // pred_check
        %p464 = pneg %p130
      $region66: #{posblock_pallas.6} parent=63 // pred_check_branch
        %466 = sbr.rel (%p464) target = $region68
      $region67: #{posblock_pallas.6} parent=63 // pred_region
        %s467 = smul.u32 2, %s18
        %p468 = scmp.lt.s32.totalorder %s467, 5
        %s469 = scalar_select %p468, %s467, 5
        %s470 = smul.addr %s469, 8
        %s471 = scalar_lea.vmem %s4, %s470
      $region68: #{posblock_pallas.6} parent=63 // pred_fallthru
        _
    $region64: #{posblock_pallas.6} parent=5 // pred_fallthru
      _
  $region6: #{posblock_pallas.6} parent=0 // loop_footer
    %s16 = sadd.s32 1, %s12
  $region7: #{posblock_pallas.6} parent=0 // loop_footer_branch
    %11 = sbr.rel target = $region3
  $region8: #{posblock_pallas.6} parent=0 // loop_exit
    _

// kernel: posblock_pallas.9
$region0: #{posblock_pallas.9}
  #allocation0 [shape = 'u32[]', space=smem, size = 0x4, offset = 0x4, fixed_abs, tag = 'smem constant byte address 0x4 - core index']
  #allocation1 [shape = 'u32[144,128]{1,0:T(1,128)}', space=vmem, size = 0x12000, scoped, tag = 'internal scratch']
  %s0 = inlined_call_operand.vmem [shape: f32[48,128], index: 0, kind: input, shape index: {}]
  %s1 = inlined_call_operand.vmem [shape: f32[2,128], index: 1, kind: input, shape index: {}]
  %s2 = inlined_call_operand.vmem [shape: f32[48,128], index: 2, kind: input, shape index: {}, may-alias: {2,3}]
  %s3 = inlined_call_operand.vmem [shape: f32[48,128], index: 3, kind: output, shape index: {}, may-alias: {2,3}]
  %s4 = sld [smem:[#allocation0]]
  $region45: #{posblock_pallas.9} parent=0
    _
  %s6 = ssub.s32 1, %s4
  %s7 = scalar_select 0, %s6, %s4
  loop: start=0, step=1, limit=5
  $region2: #{posblock_pallas.9} parent=0 // loop_pre_header
    _
  $region3: #{posblock_pallas.9} parent=0 // loop_header
    %s9 = sphi 0, %s13
    %p10 = scmp.ge.s32.totalorder %s9, 5
    %s19 = sphi 0, %s21
    %s22 = sphi 0, %s19
    %s23 = sphi 0, %s22
    %s39 = sphi 0, %s23
    %s43 = sphi 0, %s43
    %s45 = sphi 0, %s43
    %s46 = sphi 0, %s45
    %s60 = sphi 0, %s46
    %s66 = sphi 0, %s68
    %s69 = sphi 0, %s66
    %s70 = sphi 0, %s69
    %s86 = sphi 0, %s70
    %s92 = sphi 0, %s94
    %s95 = sphi 0, %s92
    %s96 = sphi 0, %s95
    %s112 = sphi 0, %s96
  $region4: #{posblock_pallas.9} parent=0 // loop_header_branch
    %12 = sbr.rel (%p10) target = $region8
  $region5: #{posblock_pallas.9} parent=0 // loop_body
    %s14 = ssub.s32 %s9, 1
    %s15 = ssub.s32 %s9, 2
    %s16 = sadd.s32 %s9, 1
    %s17 = ssub.s32 %s9, %s16
    %p18 = scmp.eq.s32.totalorder %s17, 0
    %s20 = sadd.s32 %s19, 1
    %s21 = scalar_select %p18, %s19, %s20
    %p24 = pneg %p18
    %p25 = scmp.eq.s32.totalorder %s9, 2
    %p26 = por %p24, %p25
    %p27 = scmp.ne.s32.totalorder %s19, %s22
    %p28 = scmp.eq.s32.totalorder %s9, 0
    %p29 = por %p27, %p28
    %p30 = scmp.ne.s32.totalorder %s19, %s22
    %p31 = scmp.eq.s32.totalorder %s14, 2
    %p32 = por %p30, %p31
    %p33 = scmp.ne.s32.totalorder %s22, %s23
    %p34 = scmp.eq.s32.totalorder %s14, 0
    %p35 = por %p33, %p34
    %p36 = scmp.ne.s32.totalorder %s22, %s23
    %p37 = scmp.eq.s32.totalorder %s15, 2
    %p38 = por %p36, %p37
    %p40 = scmp.ne.s32.totalorder %s23, %s39
    %p41 = scmp.eq.s32.totalorder %s15, 0
    %p42 = por %p40, %p41
    %s44 = sadd.s32 %s43, 1
    %p47 = scmp.eq.s32.totalorder %s9, 2
    %p48 = scmp.ne.s32.totalorder %s43, %s45
    %p49 = scmp.eq.s32.totalorder %s9, 0
    %p50 = por %p48, %p49
    %p51 = scmp.ne.s32.totalorder %s43, %s45
    %p52 = scmp.eq.s32.totalorder %s14, 2
    %p53 = por %p51, %p52
    %p54 = scmp.ne.s32.totalorder %s45, %s46
    %p55 = scmp.eq.s32.totalorder %s14, 0
    %p56 = por %p54, %p55
    %p57 = scmp.ne.s32.totalorder %s45, %s46
    %p58 = scmp.eq.s32.totalorder %s15, 2
    %p59 = por %p57, %p58
    %p61 = scmp.ne.s32.totalorder %s46, %s60
    %p62 = scmp.eq.s32.totalorder %s15, 0
    %p63 = por %p61, %p62
    %s64 = ssub.s32 %s9, %s16
    %p65 = scmp.eq.s32.totalorder %s64, 0
    %s67 = sadd.s32 %s66, 1
    %s68 = scalar_select %p65, %s66, %s67
    %p71 = pneg %p65
    %p72 = scmp.eq.s32.totalorder %s9, 2
    %p73 = por %p71, %p72
    %p74 = scmp.ne.s32.totalorder %s66, %s69
    %p75 = scmp.eq.s32.totalorder %s9, 0
    %p76 = por %p74, %p75
    %p77 = scmp.ne.s32.totalorder %s66, %s69
    %p78 = scmp.eq.s32.totalorder %s14, 2
    %p79 = por %p77, %p78
    %p80 = scmp.ne.s32.totalorder %s69, %s70
    %p81 = scmp.eq.s32.totalorder %s14, 0
    %p82 = por %p80, %p81
    %p83 = scmp.ne.s32.totalorder %s69, %s70
    %p84 = scmp.eq.s32.totalorder %s15, 2
    %p85 = por %p83, %p84
    %p87 = scmp.ne.s32.totalorder %s70, %s86
    %p88 = scmp.eq.s32.totalorder %s15, 0
    %p89 = por %p87, %p88
    %s90 = ssub.s32 %s9, %s16
    %p91 = scmp.eq.s32.totalorder %s90, 0
    %s93 = sadd.s32 %s92, 1
    %s94 = scalar_select %p91, %s92, %s93
    %p97 = pneg %p91
    %p98 = scmp.eq.s32.totalorder %s9, 2
    %p99 = por %p97, %p98
    %p100 = scmp.ne.s32.totalorder %s92, %s95
    %p101 = scmp.eq.s32.totalorder %s9, 0
    %p102 = por %p100, %p101
    %p103 = scmp.ne.s32.totalorder %s92, %s95
    %p104 = scmp.eq.s32.totalorder %s14, 2
    %p105 = por %p103, %p104
    %p106 = scmp.ne.s32.totalorder %s95, %s96
    %p107 = scmp.eq.s32.totalorder %s14, 0
    %p108 = por %p106, %p107
    %p109 = scmp.ne.s32.totalorder %s95, %s96
    %p110 = scmp.eq.s32.totalorder %s15, 2
    %p111 = por %p109, %p110
    %p113 = scmp.ne.s32.totalorder %s96, %s112
    %p114 = scmp.eq.s32.totalorder %s15, 0
    %p115 = por %p113, %p114
    %p116 = scmp.le.s32.totalorder 1, %s9
    %p117 = scmp.lt.s32.totalorder %s9, 4
    %p118 = pnand %p116, %p117
    %p119 = pneg %p118
    // Predicated region
    $region9: #{posblock_pallas.9} parent=5 // pred_check
      _
    $region10: #{posblock_pallas.9} parent=5 // pred_check_branch
      %121 = sbr.rel (%p118) target = $region12
    $region11: #{posblock_pallas.9} parent=5 // pred_region
      %s122 = ssub.s32 %s9, 1
      // Predicated region
      $region13: #{posblock_pallas.9} parent=11 // pred_check
        %p123 = pneg %p56
      $region14: #{posblock_pallas.9} parent=11 // pred_check_branch
        %125 = sbr.rel (%p123) target = $region16
      $region15: #{posblock_pallas.9} parent=11 // pred_region
        _
      $region16: #{posblock_pallas.9} parent=11 // pred_fallthru
        _
    $region12: #{posblock_pallas.9} parent=5 // pred_fallthru
      _
    %p126 = scmp.lt.s32.totalorder %s9, 3
    // Predicated region
    $region17: #{posblock_pallas.9} parent=5 // pred_check
      %p127 = pneg %p126
    $region18: #{posblock_pallas.9} parent=5 // pred_check_branch
      %129 = sbr.rel (%p127) target = $region20
    $region19: #{posblock_pallas.9} parent=5 // pred_region
      // Predicated region
      $region21: #{posblock_pallas.9} parent=19 // pred_check
        %p130 = pneg %p29
      $region22: #{posblock_pallas.9} parent=19 // pred_check_branch
        %132 = sbr.rel (%p130) target = $region24
      $region23: #{posblock_pallas.9} parent=19 // pred_region
        %s133 = smul.u32 2, %s9
        %p134 = scmp.lt.s32.totalorder %s133, 5
        %s135 = scalar_select %p134, %s133, 5
        %s136 = smul.addr %s135, 8
        %s137 = scalar_lea.vmem %s0, %s136
        %s138 = smul.u32 2, %s9
      $region24: #{posblock_pallas.9} parent=19 // pred_fallthru
        _
      // Predicated region
      $region25: #{posblock_pallas.9} parent=19 // pred_check
        %p139 = pneg %p76
      $region26: #{posblock_pallas.9} parent=19 // pred_check_branch
        %141 = sbr.rel (%p139) target = $region28
      $region27: #{posblock_pallas.9} parent=19 // pred_region
        %s142 = smul.u32 2, %s9
        %p143 = scmp.lt.s32.totalorder %s142, 5
        %s144 = scalar_select %p143, %s142, 5
        %s145 = smul.addr %s144, 8
        %s146 = scalar_lea.vmem %s2, %s145
        %s147 = smul.u32 2, %s9
      $region28: #{posblock_pallas.9} parent=19 // pred_fallthru
        _
    $region20: #{posblock_pallas.9} parent=5 // pred_fallthru
      _
    %p148 = scmp.le.s32.totalorder 1, %s9
    %p149 = scmp.lt.s32.totalorder %s9, 4
    %p150 = pnand %p148, %p149
    %p151 = pneg %p150
    // Predicated region
    $region29: #{posblock_pallas.9} parent=5 // pred_check
      _
    $region30: #{posblock_pallas.9} parent=5 // pred_check_branch
      %153 = sbr.rel (%p150) target = $region32
    $region31: #{posblock_pallas.9} parent=5 // pred_region
      %s154 = ssub.s32 %s9, 1
      %s155 = smul.u32 2, %s14
      %p156 = scmp.lt.s32.totalorder %s155, 5
      %s157 = scalar_select %p156, %s155, 5
      %s158 = smul.addr %s157, 8
      %s159 = scalar_lea.vmem %s0, %s158
      %p160 = pneg %p35
      %p161 = pneg %p32
      %p162 = pneg %p56
      %p163 = pneg %p53
      %s164 = smul.u32 2, %s14
      %p165 = scmp.lt.s32.totalorder %s164, 5
      %s166 = scalar_select %p165, %s164, 5
      %s167 = smul.addr %s166, 8
      %s168 = scalar_lea.vmem %s2, %s167
      %p169 = pneg %p82
      %p170 = pneg %p79
      %p171 = pneg %p108
      %p172 = pneg %p105
      %s173 = smul.u32 2, %s14
      %p174 = scmp.lt.s32.totalorder %s173, 5
      %s175 = scalar_select %p174, %s173, 5
      %s176 = smul.addr %s175, 8
      %s177 = scalar_lea.vmem %s3, %s176
      %s178 = smul.u32 2, %s14
      %p179 = scmp.lt.s32.totalorder %s178, 5
      %s180 = scalar_select %p179, %s178, 5
      %s181 = smul.addr %s180, 8
      %s182 = scalar_lea.vmem %s0, %s181
      %s183 = smul.u32 2, %s14
      %s184 = smul.u32 2, %s14
      %p185 = scmp.lt.s32.totalorder %s184, 5
      %s186 = scalar_select %p185, %s184, 5
      %s187 = smul.addr %s186, 8
      %s188 = scalar_lea.vmem %s2, %s187
      %s189 = smul.u32 2, %s14
      %s190 = smul.u32 2, %s14
      %p191 = scmp.lt.s32.totalorder %s190, 5
      %s192 = scalar_select %p191, %s190, 5
      %s193 = smul.addr %s192, 8
      %s194 = scalar_lea.vmem %s3, %s193
      %s195 = smul.u32 2, %s14
      %v196 = vld [vmem:[%s182] sm:$0xff]
      %v197 = vld [vmem:[%s182 + $0x8] sm:$0xff]
      %v198 = vld [vmem:[%s1] sm:$0x1]
      %v199 = vlaneseq
      %v200 = vshrl.u32 %v199, 7
      %v201 = vsub.s32 0, %v200
      %v202 = vrot.slane %v198, %v201
      %v203 = vmul.f32 %v196, %v202
      %v204 = vmul.f32 %v197, %v202
      %v205 = vld [vmem:[%s1 + $0x1] sm:$0x1]
      %v206 = vlaneseq
      %v207 = vshrl.u32 %v206, 7
      %v208 = vsub.s32 0, %v207
      %v209 = vrot.slane %v205, %v208
      %v210 = vadd.f32 %v203, %v209
      %v211 = vadd.f32 %v204, %v209
      %v212 = vld [vmem:[%s188] sm:$0xff]
      %v213 = vld [vmem:[%s188 + $0x8] sm:$0xff]
      %v214 = vadd.f32 %v210, %v212
      %v215 = vadd.f32 %v211, %v213
      %216 = vst [vmem:[%s194] sm:$0xff] %v214
      %217 = vst [vmem:[%s194 + $0x8] sm:$0xff] %v215
      %s218 = smul.u32 2, %s14
      %p219 = scmp.lt.s32.totalorder %s218, 5
      %s220 = scalar_select %p219, %s218, 5
      %s221 = smul.addr %s220, 8
      %s222 = scalar_lea.vmem %s3, %s221
      // Predicated region
      $region33: #{posblock_pallas.9} parent=31 // pred_check
        %p223 = pneg %p105
      $region34: #{posblock_pallas.9} parent=31 // pred_check_branch
        %225 = sbr.rel (%p223) target = $region36
      $region35: #{posblock_pallas.9} parent=31 // pred_region
        %s226 = smul.u32 2, %s14
      $region36: #{posblock_pallas.9} parent=31 // pred_fallthru
        _
    $region32: #{posblock_pallas.9} parent=5 // pred_fallthru
      _
    %p227 = scmp.le.s32.totalorder 2, %s9
    // Predicated region
    $region37: #{posblock_pallas.9} parent=5 // pred_check
      %p228 = pneg %p227
    $region38: #{posblock_pallas.9} parent=5 // pred_check_branch
      %230 = sbr.rel (%p228) target = $region40
    $region39: #{posblock_pallas.9} parent=5 // pred_region
      %s231 = ssub.s32 %s9, 2
      // Predicated region
      $region41: #{posblock_pallas.9} parent=39 // pred_check
        %p232 = pneg %p111
      $region42: #{posblock_pallas.9} parent=39 // pred_check_branch
        %234 = sbr.rel (%p232) target = $region44
      $region43: #{posblock_pallas.9} parent=39 // pred_region
        %s235 = smul.u32 2, %s15
        %p236 = scmp.lt.s32.totalorder %s235, 5
        %s237 = scalar_select %p236, %s235, 5
        %s238 = smul.addr %s237, 8
        %s239 = scalar_lea.vmem %s3, %s238
      $region44: #{posblock_pallas.9} parent=39 // pred_fallthru
        _
    $region40: #{posblock_pallas.9} parent=5 // pred_fallthru
      _
  $region6: #{posblock_pallas.9} parent=0 // loop_footer
    %s13 = sadd.s32 1, %s9
  $region7: #{posblock_pallas.9} parent=0 // loop_footer_branch
    %8 = sbr.rel target = $region3
  $region8: #{posblock_pallas.9} parent=0 // loop_exit
    _

// kernel: posblock_pallas.7
$region0: #{posblock_pallas.7}
  #allocation0 [shape = 'u32[]', space=smem, size = 0x4, offset = 0x4, fixed_abs, tag = 'smem constant byte address 0x4 - core index']
  #allocation1 [shape = 'u32[144,128]{1,0:T(1,128)}', space=vmem, size = 0x12000, scoped, tag = 'internal scratch']
  #allocation2 [shape = 'f32[1,128]{1,0:T(1,128)}', space=vmem, size = 0x200, scoped, tag = 'scratch operand']
  #allocation3 [shape = 'f32[1,128]{1,0:T(1,128)}', space=vmem, size = 0x200, scoped, tag = 'scratch operand']
  %s0 = inlined_call_operand.vmem [shape: f32[48,128], index: 0, kind: input, shape index: {}]
  %s1 = inlined_call_operand.vmem [shape: f32[2,128], index: 1, kind: input, shape index: {}]
  %s2 = inlined_call_operand.vmem [shape: f32[48,128], index: 2, kind: input, shape index: {}, may-alias: {2,5}]
  %s3 = inlined_call_operand.vmem [shape: bf16[128,128], index: 3, kind: input, shape index: {}]
  %s4 = inlined_call_operand.vmem [shape: f32[2,128], index: 4, kind: input, shape index: {}]
  %s5 = inlined_call_operand.vmem [shape: f32[48,128], index: 5, kind: output, shape index: {0}, may-alias: {2,5}]
  %s6 = inlined_call_operand.vmem [shape: bf16[48,128], index: 6, kind: output, shape index: {1}]
  %s7 = inlined_call_operand.vmem [shape: f32[2,128], index: 7, kind: output, shape index: {2}]
  %8 = xla_tuple %s5, %s6, %s7
  %s9 = sld [smem:[#allocation0]]
  $region77: #{posblock_pallas.7} parent=0
    _
  %s11 = ssub.s32 1, %s9
  %s12 = scalar_select 0, %s11, %s9
  loop: start=0, step=1, limit=5
  $region2: #{posblock_pallas.7} parent=0 // loop_pre_header
    _
  $region3: #{posblock_pallas.7} parent=0 // loop_header
    %s14 = sphi 0, %s18
    %p15 = scmp.ge.s32.totalorder %s14, 5
    %s24 = sphi 0, %s26
    %s27 = sphi 0, %s24
    %s28 = sphi 0, %s27
    %s44 = sphi 0, %s28
    %s48 = sphi 0, %s48
    %s50 = sphi 0, %s48
    %s51 = sphi 0, %s50
    %s65 = sphi 0, %s51
    %s71 = sphi 0, %s73
    %s74 = sphi 0, %s71
    %s75 = sphi 0, %s74
    %s91 = sphi 0, %s75
    %s95 = sphi 0, %s95
    %s97 = sphi 0, %s95
    %s98 = sphi 0, %s97
    %s112 = sphi 0, %s98
    %s116 = sphi 0, %s116
    %s118 = sphi 0, %s116
    %s119 = sphi 0, %s118
    %s133 = sphi 0, %s119
    %s139 = sphi 0, %s141
    %s142 = sphi 0, %s139
    %s143 = sphi 0, %s142
    %s159 = sphi 0, %s143
    %s165 = sphi 0, %s167
    %s168 = sphi 0, %s165
    %s169 = sphi 0, %s168
    %s185 = sphi 0, %s169
    %s189 = sphi 0, %s189
    %s191 = sphi 0, %s189
    %s192 = sphi 0, %s191
    %s206 = sphi 0, %s192
  $region4: #{posblock_pallas.7} parent=0 // loop_header_branch
    %17 = sbr.rel (%p15) target = $region8
  $region5: #{posblock_pallas.7} parent=0 // loop_body
    %s19 = ssub.s32 %s14, 1
    %s20 = ssub.s32 %s14, 2
    %s21 = sadd.s32 %s14, 1
    %s22 = ssub.s32 %s14, %s21
    %p23 = scmp.eq.s32.totalorder %s22, 0
    %s25 = sadd.s32 %s24, 1
    %s26 = scalar_select %p23, %s24, %s25
    %p29 = pneg %p23
    %p30 = scmp.eq.s32.totalorder %s14, 2
    %p31 = por %p29, %p30
    %p32 = scmp.ne.s32.totalorder %s24, %s27
    %p33 = scmp.eq.s32.totalorder %s14, 0
    %p34 = por %p32, %p33
    %p35 = scmp.ne.s32.totalorder %s24, %s27
    %p36 = scmp.eq.s32.totalorder %s19, 2
    %p37 = por %p35, %p36
    %p38 = scmp.ne.s32.totalorder %s27, %s28
    %p39 = scmp.eq.s32.totalorder %s19, 0
    %p40 = por %p38, %p39
    %p41 = scmp.ne.s32.totalorder %s27, %s28
    %p42 = scmp.eq.s32.totalorder %s20, 2
    %p43 = por %p41, %p42
    %p45 = scmp.ne.s32.totalorder %s28, %s44
    %p46 = scmp.eq.s32.totalorder %s20, 0
    %p47 = por %p45, %p46
    %s49 = sadd.s32 %s48, 1
    %p52 = scmp.eq.s32.totalorder %s14, 2
    %p53 = scmp.ne.s32.totalorder %s48, %s50
    %p54 = scmp.eq.s32.totalorder %s14, 0
    %p55 = por %p53, %p54
    %p56 = scmp.ne.s32.totalorder %s48, %s50
    %p57 = scmp.eq.s32.totalorder %s19, 2
    %p58 = por %p56, %p57
    %p59 = scmp.ne.s32.totalorder %s50, %s51
    %p60 = scmp.eq.s32.totalorder %s19, 0
    %p61 = por %p59, %p60
    %p62 = scmp.ne.s32.totalorder %s50, %s51
    %p63 = scmp.eq.s32.totalorder %s20, 2
    %p64 = por %p62, %p63
    %p66 = scmp.ne.s32.totalorder %s51, %s65
    %p67 = scmp.eq.s32.totalorder %s20, 0
    %p68 = por %p66, %p67
    %s69 = ssub.s32 %s14, %s21
    %p70 = scmp.eq.s32.totalorder %s69, 0
    %s72 = sadd.s32 %s71, 1
    %s73 = scalar_select %p70, %s71, %s72
    %p76 = pneg %p70
    %p77 = scmp.eq.s32.totalorder %s14, 2
    %p78 = por %p76, %p77
    %p79 = scmp.ne.s32.totalorder %s71, %s74
    %p80 = scmp.eq.s32.totalorder %s14, 0
    %p81 = por %p79, %p80
    %p82 = scmp.ne.s32.totalorder %s71, %s74
    %p83 = scmp.eq.s32.totalorder %s19, 2
    %p84 = por %p82, %p83
    %p85 = scmp.ne.s32.totalorder %s74, %s75
    %p86 = scmp.eq.s32.totalorder %s19, 0
    %p87 = por %p85, %p86
    %p88 = scmp.ne.s32.totalorder %s74, %s75
    %p89 = scmp.eq.s32.totalorder %s20, 2
    %p90 = por %p88, %p89
    %p92 = scmp.ne.s32.totalorder %s75, %s91
    %p93 = scmp.eq.s32.totalorder %s20, 0
    %p94 = por %p92, %p93
    %s96 = sadd.s32 %s95, 1
    %p99 = scmp.eq.s32.totalorder %s14, 2
    %p100 = scmp.ne.s32.totalorder %s95, %s97
    %p101 = scmp.eq.s32.totalorder %s14, 0
    %p102 = por %p100, %p101
    %p103 = scmp.ne.s32.totalorder %s95, %s97
    %p104 = scmp.eq.s32.totalorder %s19, 2
    %p105 = por %p103, %p104
    %p106 = scmp.ne.s32.totalorder %s97, %s98
    %p107 = scmp.eq.s32.totalorder %s19, 0
    %p108 = por %p106, %p107
    %p109 = scmp.ne.s32.totalorder %s97, %s98
    %p110 = scmp.eq.s32.totalorder %s20, 2
    %p111 = por %p109, %p110
    %p113 = scmp.ne.s32.totalorder %s98, %s112
    %p114 = scmp.eq.s32.totalorder %s20, 0
    %p115 = por %p113, %p114
    %s117 = sadd.s32 %s116, 1
    %p120 = scmp.eq.s32.totalorder %s14, 2
    %p121 = scmp.ne.s32.totalorder %s116, %s118
    %p122 = scmp.eq.s32.totalorder %s14, 0
    %p123 = por %p121, %p122
    %p124 = scmp.ne.s32.totalorder %s116, %s118
    %p125 = scmp.eq.s32.totalorder %s19, 2
    %p126 = por %p124, %p125
    %p127 = scmp.ne.s32.totalorder %s118, %s119
    %p128 = scmp.eq.s32.totalorder %s19, 0
    %p129 = por %p127, %p128
    %p130 = scmp.ne.s32.totalorder %s118, %s119
    %p131 = scmp.eq.s32.totalorder %s20, 2
    %p132 = por %p130, %p131
    %p134 = scmp.ne.s32.totalorder %s119, %s133
    %p135 = scmp.eq.s32.totalorder %s20, 0
    %p136 = por %p134, %p135
    %s137 = ssub.s32 %s14, %s21
    %p138 = scmp.eq.s32.totalorder %s137, 0
    %s140 = sadd.s32 %s139, 1
    %s141 = scalar_select %p138, %s139, %s140
    %p144 = pneg %p138
    %p145 = scmp.eq.s32.totalorder %s14, 2
    %p146 = por %p144, %p145
    %p147 = scmp.ne.s32.totalorder %s139, %s142
    %p148 = scmp.eq.s32.totalorder %s14, 0
    %p149 = por %p147, %p148
    %p150 = scmp.ne.s32.totalorder %s139, %s142
    %p151 = scmp.eq.s32.totalorder %s19, 2
    %p152 = por %p150, %p151
    %p153 = scmp.ne.s32.totalorder %s142, %s143
    %p154 = scmp.eq.s32.totalorder %s19, 0
    %p155 = por %p153, %p154
    %p156 = scmp.ne.s32.totalorder %s142, %s143
    %p157 = scmp.eq.s32.totalorder %s20, 2
    %p158 = por %p156, %p157
    %p160 = scmp.ne.s32.totalorder %s143, %s159
    %p161 = scmp.eq.s32.totalorder %s20, 0
    %p162 = por %p160, %p161
    %s163 = ssub.s32 %s14, %s21
    %p164 = scmp.eq.s32.totalorder %s163, 0
    %s166 = sadd.s32 %s165, 1
    %s167 = scalar_select %p164, %s165, %s166
    %p170 = pneg %p164
    %p171 = scmp.eq.s32.totalorder %s14, 2
    %p172 = por %p170, %p171
    %p173 = scmp.ne.s32.totalorder %s165, %s168
    %p174 = scmp.eq.s32.totalorder %s14, 0
    %p175 = por %p173, %p174
    %p176 = scmp.ne.s32.totalorder %s165, %s168
    %p177 = scmp.eq.s32.totalorder %s19, 2
    %p178 = por %p176, %p177
    %p179 = scmp.ne.s32.totalorder %s168, %s169
    %p180 = scmp.eq.s32.totalorder %s19, 0
    %p181 = por %p179, %p180
    %p182 = scmp.ne.s32.totalorder %s168, %s169
    %p183 = scmp.eq.s32.totalorder %s20, 2
    %p184 = por %p182, %p183
    %p186 = scmp.ne.s32.totalorder %s169, %s185
    %p187 = scmp.eq.s32.totalorder %s20, 0
    %p188 = por %p186, %p187
    %s190 = sadd.s32 %s189, 1
    %p193 = scmp.eq.s32.totalorder %s14, 2
    %p194 = scmp.ne.s32.totalorder %s189, %s191
    %p195 = scmp.eq.s32.totalorder %s14, 0
    %p196 = por %p194, %p195
    %p197 = scmp.ne.s32.totalorder %s189, %s191
    %p198 = scmp.eq.s32.totalorder %s19, 2
    %p199 = por %p197, %p198
    %p200 = scmp.ne.s32.totalorder %s191, %s192
    %p201 = scmp.eq.s32.totalorder %s19, 0
    %p202 = por %p200, %p201
    %p203 = scmp.ne.s32.totalorder %s191, %s192
    %p204 = scmp.eq.s32.totalorder %s20, 2
    %p205 = por %p203, %p204
    %p207 = scmp.ne.s32.totalorder %s192, %s206
    %p208 = scmp.eq.s32.totalorder %s20, 0
    %p209 = por %p207, %p208
    %p210 = scmp.le.s32.totalorder 1, %s14
    %p211 = scmp.lt.s32.totalorder %s14, 4
    %p212 = pnand %p210, %p211
    %p213 = pneg %p212
    // Predicated region
    $region9: #{posblock_pallas.7} parent=5 // pred_check
      _
    $region10: #{posblock_pallas.7} parent=5 // pred_check_branch
      %215 = sbr.rel (%p212) target = $region12
    $region11: #{posblock_pallas.7} parent=5 // pred_region
      %s216 = ssub.s32 %s14, 1
      // Predicated region
      $region13: #{posblock_pallas.7} parent=11 // pred_check
        %p217 = pneg %p61
      $region14: #{posblock_pallas.7} parent=11 // pred_check_branch
        %219 = sbr.rel (%p217) target = $region16
      $region15: #{posblock_pallas.7} parent=11 // pred_region
        _
      $region16: #{posblock_pallas.7} parent=11 // pred_fallthru
        _
      // Predicated region
      $region17: #{posblock_pallas.7} parent=11 // pred_check
        %p220 = pneg %p108
      $region18: #{posblock_pallas.7} parent=11 // pred_check_branch
        %222 = sbr.rel (%p220) target = $region20
      $region19: #{posblock_pallas.7} parent=11 // pred_region
        _
      $region20: #{posblock_pallas.7} parent=11 // pred_fallthru
        _
      // Predicated region
      $region21: #{posblock_pallas.7} parent=11 // pred_check
        %p223 = pneg %p129
      $region22: #{posblock_pallas.7} parent=11 // pred_check_branch
        %225 = sbr.rel (%p223) target = $region24
      $region23: #{posblock_pallas.7} parent=11 // pred_region
        _
      $region24: #{posblock_pallas.7} parent=11 // pred_fallthru
        _
    $region12: #{posblock_pallas.7} parent=5 // pred_fallthru
      _
    %p226 = scmp.lt.s32.totalorder %s14, 3
    // Predicated region
    $region25: #{posblock_pallas.7} parent=5 // pred_check
      %p227 = pneg %p226
    $region26: #{posblock_pallas.7} parent=5 // pred_check_branch
      %229 = sbr.rel (%p227) target = $region28
    $region27: #{posblock_pallas.7} parent=5 // pred_region
      // Predicated region
      $region29: #{posblock_pallas.7} parent=27 // pred_check
        %p230 = pneg %p34
      $region30: #{posblock_pallas.7} parent=27 // pred_check_branch
        %232 = sbr.rel (%p230) target = $region32
      $region31: #{posblock_pallas.7} parent=27 // pred_region
        %s233 = smul.u32 2, %s14
        %p234 = scmp.lt.s32.totalorder %s233, 5
        %s235 = scalar_select %p234, %s233, 5
        %s236 = smul.addr %s235, 8
        %s237 = scalar_lea.vmem %s0, %s236
        %s238 = smul.u32 2, %s14
      $region32: #{posblock_pallas.7} parent=27 // pred_fallthru
        _
      // Predicated region
      $region33: #{posblock_pallas.7} parent=27 // pred_check
        %p239 = pneg %p81
      $region34: #{posblock_pallas.7} parent=27 // pred_check_branch
        %241 = sbr.rel (%p239) target = $region36
      $region35: #{posblock_pallas.7} parent=27 // pred_region
        %s242 = smul.u32 2, %s14
        %p243 = scmp.lt.s32.totalorder %s242, 5
        %s244 = scalar_select %p243, %s242, 5
        %s245 = smul.addr %s244, 8
        %s246 = scalar_lea.vmem %s2, %s245
        %s247 = smul.u32 2, %s14
      $region36: #{posblock_pallas.7} parent=27 // pred_fallthru
        _
    $region28: #{posblock_pallas.7} parent=5 // pred_fallthru
      _
    %p248 = scmp.le.s32.totalorder 1, %s14
    %p249 = scmp.lt.s32.totalorder %s14, 4
    %p250 = pnand %p248, %p249
    %p251 = pneg %p250
    // Predicated region
    $region37: #{posblock_pallas.7} parent=5 // pred_check
      _
    $region38: #{posblock_pallas.7} parent=5 // pred_check_branch
      %253 = sbr.rel (%p250) target = $region40
    $region39: #{posblock_pallas.7} parent=5 // pred_region
      %s254 = ssub.s32 %s14, 1
      %s255 = smul.u32 2, %s19
      %p256 = scmp.lt.s32.totalorder %s255, 5
      %s257 = scalar_select %p256, %s255, 5
      %s258 = smul.addr %s257, 8
      %s259 = scalar_lea.vmem %s0, %s258
      %p260 = pneg %p40
      %p261 = pneg %p37
      %p262 = pneg %p61
      %p263 = pneg %p58
      %s264 = smul.u32 2, %s19
      %p265 = scmp.lt.s32.totalorder %s264, 5
      %s266 = scalar_select %p265, %s264, 5
      %s267 = smul.addr %s266, 8
      %s268 = scalar_lea.vmem %s2, %s267
      %p269 = pneg %p87
      %p270 = pneg %p84
      %p271 = pneg %p108
      %p272 = pneg %p105
      %p273 = pneg %p129
      %p274 = pneg %p126
      %p275 = pneg %p155
      %p276 = pneg %p152
      %s277 = smul.u32 2, %s19
      %p278 = scmp.lt.s32.totalorder %s277, 5
      %s279 = scalar_select %p278, %s277, 5
      %s280 = smul.addr %s279, 8
      %s281 = scalar_lea.vmem %s5, %s280
      %p282 = pneg %p181
      %p283 = pneg %p178
      %s284 = smul.u32 2, %s19
      %p285 = scmp.lt.s32.totalorder %s284, 5
      %s286 = scalar_select %p285, %s284, 5
      %s287 = smul.addr %s286, 4
      %s288 = scalar_lea.vmem %s6, %s287
      %p289 = pneg %p202
      %p290 = pneg %p199
      %s291 = smul.u32 2, %s19
      %p292 = scmp.lt.s32.totalorder %s291, 5
      %s293 = scalar_select %p292, %s291, 5
      %s294 = smul.addr %s293, 8
      %s295 = scalar_lea.vmem %s0, %s294
      %s296 = smul.u32 2, %s19
      %s297 = smul.u32 2, %s19
      %p298 = scmp.lt.s32.totalorder %s297, 5
      %s299 = scalar_select %p298, %s297, 5
      %s300 = smul.addr %s299, 8
      %s301 = scalar_lea.vmem %s2, %s300
      %s302 = smul.u32 2, %s19
      %s303 = smul.u32 2, %s19
      %p304 = scmp.lt.s32.totalorder %s303, 5
      %s305 = scalar_select %p304, %s303, 5
      %s306 = smul.addr %s305, 8
      %s307 = scalar_lea.vmem %s5, %s306
      %s308 = smul.u32 2, %s19
      %s309 = smul.u32 2, %s19
      %p310 = scmp.lt.s32.totalorder %s309, 5
      %s311 = scalar_select %p310, %s309, 5
      %s312 = smul.addr %s311, 4
      %s313 = scalar_lea.vmem %s6, %s312
      %s314 = smul.u32 2, %s19
      %p316 = scmp.eq.s32.totalorder %s19, 0
      // Predicated region
      $region41: #{posblock_pallas.7} parent=39 // pred_check
        %p317 = pneg %p316
      $region42: #{posblock_pallas.7} parent=39 // pred_check_branch
        %319 = sbr.rel (%p317) target = $region44
      $region43: #{posblock_pallas.7} parent=39 // pred_region
        %320 = vst [vmem:[#allocation2] sm:$0x1] 0.0
        %321 = vst [vmem:[#allocation3] sm:$0x1] 0.0
      $region44: #{posblock_pallas.7} parent=39 // pred_fallthru
        _
      %v322 = vld [vmem:[%s295] sm:$0xff]
      %v323 = vld [vmem:[%s295 + $0x8] sm:$0xff]
      %v324 = vld [vmem:[%s1] sm:$0x1]
      %v325 = vlaneseq
      %v326 = vshrl.u32 %v325, 7
      %v327 = vsub.s32 0, %v326
      %v328 = vrot.slane %v324, %v327
      %v329 = vmul.f32 %v322, %v328
      %v330 = vmul.f32 %v323, %v328
      %v331 = vld [vmem:[%s1 + $0x1] sm:$0x1]
      %v332 = vlaneseq
      %v333 = vshrl.u32 %v332, 7
      %v334 = vsub.s32 0, %v333
      %v335 = vrot.slane %v331, %v334
      %v336 = vadd.f32 %v329, %v335
      %v337 = vadd.f32 %v330, %v335
      %v338 = vld [vmem:[%s301] sm:$0xff]
      %v339 = vld [vmem:[%s301 + $0x8] sm:$0xff]
      %v340 = vadd.f32 %v336, %v338
      %v341 = vadd.f32 %v337, %v339
      %s342 = smul.u32 %s19, 16
      %v343 = vlaneseq
      %v344 = vshrl.u32 %v343, 7
      %v345 = vadd.s32 %v344, 8
      %v346 = vstv %s342
      %v347 = vadd.s32 %v346, %v344
      %v348 = vadd.s32 %v346, %v345
      %vm349 = vcmp.lt.s32.totalorder %v347, 40
      %vm350 = vcmp.lt.s32.totalorder %v348, 40
      %v351 = vsel %vm349, 1, 0
      %v352 = vsel %vm350, 1, 0
      %vm353 = vcmp.eq.s32.totalorder %v351, 1
      %vm354 = vcmp.eq.s32.totalorder %v352, 1
      %v355 = vsel %vm353, %v340, 0.0
      %v356 = vsel %vm354, %v341, 0.0
      %357 = vst [vmem:[%s307] sm:$0xff] %v355
      %358 = vst [vmem:[%s307 + $0x8] sm:$0xff] %v356
      %v359 = vpack.c.bf16 %v356, %v355
      %v360 = vld [vmem:[%s3] sm:$0xf]
      %v361 = vld [vmem:[%s3 + $0x4] sm:$0xf]
      %v362 = vld [vmem:[%s3 + $0x8] sm:$0xf]
      %v363 = vld [vmem:[%s3 + $0xc] sm:$0xf]
      %v364 = vld [vmem:[%s3 + $0x10] sm:$0xf]
      %v365 = vld [vmem:[%s3 + $0x14] sm:$0xf]
      %v366 = vld [vmem:[%s3 + $0x18] sm:$0xf]
      %v367 = vld [vmem:[%s3 + $0x1c] sm:$0xf]
      %v368 = vld [vmem:[%s3 + $0x20] sm:$0xf]
      %v369 = vld [vmem:[%s3 + $0x24] sm:$0xf]
      %v370 = vld [vmem:[%s3 + $0x28] sm:$0xf]
      %v371 = vld [vmem:[%s3 + $0x2c] sm:$0xf]
      %v372 = vld [vmem:[%s3 + $0x30] sm:$0xf]
      %v373 = vld [vmem:[%s3 + $0x34] sm:$0xf]
      %v374 = vld [vmem:[%s3 + $0x38] sm:$0xf]
      %v375 = vld [vmem:[%s3 + $0x3c] sm:$0xf]
      %v392 = vunpack.c.l.b16 %v360
      %v393 = vunpack.c.l.b16 %v361
      %v394 = vunpack.c.l.b16 %v362
      %v395 = vunpack.c.l.b16 %v363
      %v396 = vunpack.c.l.b16 %v364
      %v397 = vunpack.c.l.b16 %v365
      %v398 = vunpack.c.l.b16 %v366
      %v399 = vunpack.c.l.b16 %v367
      %v400 = vunpack.c.l.b16 %v368
      %v401 = vunpack.c.l.b16 %v369
      %v402 = vunpack.c.l.b16 %v370
      %v403 = vunpack.c.l.b16 %v371
      %v404 = vunpack.c.l.b16 %v372
      %v405 = vunpack.c.l.b16 %v373
      %v406 = vunpack.c.l.b16 %v374
      %v407 = vunpack.c.l.b16 %v375
      %v408 = vpack.c.b16 %v393, %v392
      %v409 = vpack.c.b16 %v395, %v394
      %v410 = vpack.c.b16 %v397, %v396
      %v411 = vpack.c.b16 %v399, %v398
      %v412 = vpack.c.b16 %v401, %v400
      %v413 = vpack.c.b16 %v403, %v402
      %v414 = vpack.c.b16 %v405, %v404
      %v415 = vpack.c.b16 %v407, %v406
      %424 = vmatprep.subr.bf16.mxu0 0
      %425 = vmatpush1.bf16.msra.mxu0 %v408
      %426 = vmatprep.subr.bf16.mxu0 0
      %427 = vmatpush1.bf16.msra.mxu0 %v409
      %428 = vmatprep.subr.bf16.mxu0 0
      %429 = vmatpush1.bf16.msra.mxu0 %v410
      %430 = vmatprep.subr.bf16.mxu0 0
      %431 = vmatpush1.bf16.msra.mxu0 %v411
      %432 = vmatprep.subr.bf16.mxu0 0
      %433 = vmatpush1.bf16.msra.mxu0 %v412
      %434 = vmatprep.subr.bf16.mxu0 0
      %435 = vmatpush1.bf16.msra.mxu0 %v413
      %436 = vmatprep.subr.bf16.mxu0 0
      %437 = vmatpush1.bf16.msra.mxu0 %v414
      %438 = vmatprep.subr.bf16.mxu0 0
      %439 = vmatpush1.bf16.msra.mxu0 %v415
      %440 = vmatprep.subr.bf16.mxu0 0
      %441 = vmatpush1.bf16.msra.mxu0 0
      %442 = vmatprep.subr.bf16.mxu0 0
      %443 = vmatpush1.bf16.msra.mxu0 0
      %444 = vmatprep.subr.bf16.mxu0 0
      %445 = vmatpush1.bf16.msra.mxu0 0
      %446 = vmatprep.subr.bf16.mxu0 0
      %447 = vmatpush1.bf16.msra.mxu0 0
      %448 = vmatprep.subr.bf16.mxu0 0
      %449 = vmatpush1.bf16.msra.mxu0 0
      %450 = vmatprep.subr.bf16.mxu0 0
      %451 = vmatpush1.bf16.msra.mxu0 0
      %452 = vmatprep.subr.bf16.mxu0 0
      %453 = vmatpush1.bf16.msra.mxu0 0
      %454 = vmatprep.subr.bf16.mxu0 0
      %455 = vmatpush1.bf16.msra.mxu0 0
      %456 = vmatprep.mubr.bf16.mxu0 0
      %457 = vmatmul.mubr.bf16.gmra.mrb[0].mxu0 %v359
      %v458 = vpop.f32.mrb[0].mxu0
      %v459 = vadd.f32 0.0, %v458
      %v460 = vpop.f32.mrb[0].mxu0
      %v461 = vpop.f32.mrb[0].mxu0
      %v462 = vadd.f32 0.0, %v461
      %v463 = vpop.f32.mrb[0].mxu0
      %464 = vdwg.mxu0
      %v465 = vpack.c.bf16 %v462, %v459
      %v467 = vunpack.c.l.b16 %v465
      %v468 = vunpack.c.h.b16 %v465
      %v469 = vpack.c.b16 %v467, %v467
      %v470 = vpack.c.b16 %v468, %v468
      %473 = vst [vmem:[%s313] sm:$0xf] %v469
      %474 = vst [vmem:[%s313 + $0x4] sm:$0xf] %v470
      %v475 = vunpack.c.l.bf16 %v465
      %v476 = vunpack.c.h.bf16 %v465
      %v477 = vld [vmem:[#allocation2] sm:$0x1]
      %v478 = vadd.f32 %v475, %v476
      %v479 = vrot.slane %v478, 4
      %v480 = vadd.f32 %v478, %v479
      %v481 = vrot.slane %v480, 2
      %v482 = vadd.f32 %v480, %v481
      %v483 = vrot.slane %v482, 1
      %v484 = vadd.f32 %v482, %v483
      %v485 = vadd.f32 %v477, %v484
      %486 = vst [vmem:[#allocation2] sm:$0x1] %v485
      %v487 = vld [vmem:[#allocation3] sm:$0x1]
      %v488 = vmul.f32 %v475, %v475
      %v489 = vmul.f32 %v476, %v476
      %v490 = vadd.f32 %v488, %v489
      %v491 = vrot.slane %v490, 4
      %v492 = vadd.f32 %v490, %v491
      %v493 = vrot.slane %v492, 2
      %v494 = vadd.f32 %v492, %v493
      %v495 = vrot.slane %v494, 1
      %v496 = vadd.f32 %v494, %v495
      %v497 = vadd.f32 %v487, %v496
      %498 = vst [vmem:[#allocation3] sm:$0x1] %v497
      %p499 = scmp.eq.s32.totalorder %s19, 2
      // Predicated region
      $region45: #{posblock_pallas.7} parent=39 // pred_check
        %p500 = pneg %p499
      $region46: #{posblock_pallas.7} parent=39 // pred_check_branch
        %502 = sbr.rel (%p500) target = $region48
      $region47: #{posblock_pallas.7} parent=39 // pred_region
        %v503 = vld [vmem:[#allocation2] sm:$0x1]
        %v504 = vmul.f32 %v503, 0.025
        %v505 = vld [vmem:[#allocation3] sm:$0x1]
        %v506 = vmul.f32 %v505, 0.025
        %v507 = vmul.f32 %v504, %v504
        %v508 = vsub.f32 %v506, %v507
        %v509 = vmax.f32 %v508, 0.0
        %v510 = vld [vmem:[%s4] sm:$0x1]
        %v511 = vadd.f32 %v509, 1e-05
        %v512 = vrsqrt.pop %v511
        %v513 = vmul.f32 %v510, %v512
        %514 = vst [vmem:[%s7] sm:$0x1] %v513
        %v515 = vld [vmem:[%s4 + $0x1] sm:$0x1]
        %v516 = vmul.f32 %v504, %v513
        %v517 = vsub.f32 %v515, %v516
        %518 = vst [vmem:[%s7 + $0x1] sm:$0x1] %v517
      $region48: #{posblock_pallas.7} parent=39 // pred_fallthru
        _
      %s519 = smul.u32 2, %s19
      %p520 = scmp.lt.s32.totalorder %s519, 5
      %s521 = scalar_select %p520, %s519, 5
      %s522 = smul.addr %s521, 8
      %s523 = scalar_lea.vmem %s5, %s522
      %s524 = smul.u32 2, %s19
      %p525 = scmp.lt.s32.totalorder %s524, 5
      %s526 = scalar_select %p525, %s524, 5
      %s527 = smul.addr %s526, 4
      %s528 = scalar_lea.vmem %s6, %s527
      // Predicated region
      $region49: #{posblock_pallas.7} parent=39 // pred_check
        %p529 = pneg %p152
      $region50: #{posblock_pallas.7} parent=39 // pred_check_branch
        %531 = sbr.rel (%p529) target = $region52
      $region51: #{posblock_pallas.7} parent=39 // pred_region
        %s532 = smul.u32 2, %s19
      $region52: #{posblock_pallas.7} parent=39 // pred_fallthru
        _
      // Predicated region
      $region53: #{posblock_pallas.7} parent=39 // pred_check
        %p533 = pneg %p178
      $region54: #{posblock_pallas.7} parent=39 // pred_check_branch
        %535 = sbr.rel (%p533) target = $region56
      $region55: #{posblock_pallas.7} parent=39 // pred_region
        %s536 = smul.u32 2, %s19
      $region56: #{posblock_pallas.7} parent=39 // pred_fallthru
        _
      // Predicated region
      $region57: #{posblock_pallas.7} parent=39 // pred_check
        %p537 = pneg %p199
      $region58: #{posblock_pallas.7} parent=39 // pred_check_branch
        %539 = sbr.rel (%p537) target = $region60
      $region59: #{posblock_pallas.7} parent=39 // pred_region
        _
      $region60: #{posblock_pallas.7} parent=39 // pred_fallthru
        _
      // Predicated region
      $region61: #{posblock_pallas.7} parent=39 // pred_check
        %p540 = pneg %p199
      $region62: #{posblock_pallas.7} parent=39 // pred_check_branch
        %542 = sbr.rel (%p540) target = $region64
      $region63: #{posblock_pallas.7} parent=39 // pred_region
        _
      $region64: #{posblock_pallas.7} parent=39 // pred_fallthru
        _
    $region40: #{posblock_pallas.7} parent=5 // pred_fallthru
      _
    %p543 = scmp.le.s32.totalorder 2, %s14
    // Predicated region
    $region65: #{posblock_pallas.7} parent=5 // pred_check
      %p544 = pneg %p543
    $region66: #{posblock_pallas.7} parent=5 // pred_check_branch
      %546 = sbr.rel (%p544) target = $region68
    $region67: #{posblock_pallas.7} parent=5 // pred_region
      %s547 = ssub.s32 %s14, 2
      // Predicated region
      $region69: #{posblock_pallas.7} parent=67 // pred_check
        %p548 = pneg %p158
      $region70: #{posblock_pallas.7} parent=67 // pred_check_branch
        %550 = sbr.rel (%p548) target = $region72
      $region71: #{posblock_pallas.7} parent=67 // pred_region
        %s551 = smul.u32 2, %s20
        %p552 = scmp.lt.s32.totalorder %s551, 5
        %s553 = scalar_select %p552, %s551, 5
        %s554 = smul.addr %s553, 8
        %s555 = scalar_lea.vmem %s5, %s554
      $region72: #{posblock_pallas.7} parent=67 // pred_fallthru
        _
      // Predicated region
      $region73: #{posblock_pallas.7} parent=67 // pred_check
        %p556 = pneg %p184
      $region74: #{posblock_pallas.7} parent=67 // pred_check_branch
        %558 = sbr.rel (%p556) target = $region76
      $region75: #{posblock_pallas.7} parent=67 // pred_region
        %s559 = smul.u32 2, %s20
        %p560 = scmp.lt.s32.totalorder %s559, 5
        %s561 = scalar_select %p560, %s559, 5
        %s562 = smul.addr %s561, 4
        %s563 = scalar_lea.vmem %s6, %s562
      $region76: #{posblock_pallas.7} parent=67 // pred_fallthru
        _
    $region68: #{posblock_pallas.7} parent=5 // pred_fallthru
      _
  $region6: #{posblock_pallas.7} parent=0 // loop_footer
    %s18 = sadd.s32 1, %s14
  $region7: #{posblock_pallas.7} parent=0 // loop_footer_branch
    %13 = sbr.rel target = $region3
  $region8: #{posblock_pallas.7} parent=0 // loop_exit
    _

</llo_original>
